<compile_context>
chip_gen: v7x
topology: tpu7x:2x2x1
jax: 0.10.0
libtpu: 0.0.40
codegen_flags: <defaults>
</compile_context>

<pallas_src>
import functools
import math

import jax
import jax.numpy as jnp
from jax import lax
from jax.experimental import pallas as pl
from jax.experimental.pallas import tpu as pltpu

_INV_SQRT2 = 1.0 / math.sqrt(2.0)
# Safe on v5e/v6e (128 MiB physical) and v7x (64 MiB physical); on v5e/v6e this
# could go toward ~100 MiB if kernel-1 tiles ever hit the cap.
_VMEM_LIMIT = 48 * 1024 * 1024


# ---------------------------------------------------------------------------
# Kernel 1: LayerNorm + exact GELU + fused input projection (both directions)
#   x_rows : (R, D) f32, rows ordered t*Bp + b (time-major, batch padded)
#   w      : (2, D, 3*Hp) bf16  per direction [r|z|n], each gate padded to Hp
#   bias   : (2, 1, 3*Hp) f32   b_ih (+ b_hh for r,z gates) pre-folded
#   gx     : (2, R, 3*Hp) bf16
# ---------------------------------------------------------------------------
def _ln_gelu_proj_kernel(x_ref, gamma_ref, beta_ref, w_ref, b_ref, gx_ref):
    x = x_ref[...].astype(jnp.float32)
    mean = jnp.mean(x, axis=-1, keepdims=True)
    var = jnp.mean(jnp.square(x - mean), axis=-1, keepdims=True)
    y = (x - mean) * lax.rsqrt(var + 1e-5)
    y = y * gamma_ref[...] + beta_ref[...]
    # exact erf-based GELU (matches torch.nn.functional.gelu default)
    y = 0.5 * y * (1.0 + lax.erf(y * _INV_SQRT2))
    yb = y.astype(jnp.bfloat16)
    gx_ref[0] = (jnp.dot(yb, w_ref[0], preferred_element_type=jnp.float32)
                 + b_ref[0]).astype(gx_ref.dtype)
    gx_ref[1] = (jnp.dot(yb, w_ref[1], preferred_element_type=jnp.float32)
                 + b_ref[1]).astype(gx_ref.dtype)


def ln_gelu_proj(x_rows, gamma, beta, w_ih, b_gx, *, row_tile=1024):
    R, D = x_rows.shape
    G3 = w_ih.shape[2]
    rt = min(row_tile, R)
    return pl.pallas_call(
        _ln_gelu_proj_kernel,
        out_shape=jax.ShapeDtypeStruct((2, R, G3), jnp.bfloat16),
        grid=(pl.cdiv(R, rt),),
        in_specs=[
            pl.BlockSpec((rt, D), lambda i: (i, 0)),
            pl.BlockSpec((1, D), lambda i: (0, 0)),
            pl.BlockSpec((1, D), lambda i: (0, 0)),
            # TODO(synk): single-buffer these loop-invariant operands with
            # pipeline_mode=pl.Buffered(1) to reclaim VMEM headroom on v7x.
            pl.BlockSpec((2, D, G3), lambda i: (0, 0, 0)),
            pl.BlockSpec((2, 1, G3), lambda i: (0, 0, 0)),
        ],
        out_specs=pl.BlockSpec((2, rt, G3), lambda i: (0, i, 0)),
        compiler_params=pltpu.CompilerParams(
            dimension_semantics=("parallel",),
            vmem_limit_bytes=_VMEM_LIMIT),
    )(x_rows, gamma.reshape(1, D), beta.reshape(1, D), w_ih, b_gx)


# ---------------------------------------------------------------------------
# Kernel 2: bidirectional GRU recurrence (PyTorch gate order r, z, n),
# gridded over (direction, time-chunk).  Per grid step the kernel sees one
# (tc, Bp, 3Hp) gx chunk of its own direction and writes one (tc, Bp, Hp)
# output chunk; the hidden state is carried in a VMEM scratch across chunks.
# ---------------------------------------------------------------------------
def _bigru_kernel(gx_ref, whh_ref, bhn_ref, out_ref, h_ref, *, hp, tc):
    Hp = hp
    d = pl.program_id(0)        # 0 = forward chain, 1 = backward chain
    c = pl.program_id(1)        # chunk index along the sequential time axis

    @pl.when(c == 0)
    def _():                    # PyTorch default h_0 = 0
        h_ref[...] = jnp.zeros_like(h_ref)

    # loop-invariant operands hoisted out of the sequential loop
    whh = whh_ref[0]                                            # (Hp, 3Hp) bf16
    bhn = jnp.broadcast_to(bhn_ref[0], (h_ref.shape[0], Hp))    # (Bp, Hp) f32

    def step(i, h):
        # forward walks its chunk 0..tc-1, backward walks it tc-1..0
        li = i + d * (tc - 1 - 2 * i)
        gx = gx_ref[0, li].astype(jnp.float32)                  # (Bp, 3Hp)
        gh = jnp.dot(h.astype(jnp.bfloat16), whh,
                     preferred_element_type=jnp.float32)        # (Bp, 3Hp)
        r = jax.nn.sigmoid(gx[:, :Hp] + gh[:, :Hp])
        z = jax.nn.sigmoid(gx[:, Hp:2 * Hp] + gh[:, Hp:2 * Hp])
        n = jnp.tanh(gx[:, 2 * Hp:] + r * (gh[:, 2 * Hp:] + bhn))
        h_new = (1.0 - z) * n + z * h
        out_ref[0, li] = h_new
        return h_new

    h_ref[...] = lax.fori_loop(0, tc, step, h_ref[...])


def _choose_time_chunk(T, target):
    if T <= target:
        return T
    for tc in range(target, 0, -1):
        if T % tc == 0:
            return tc
    return T


def bigru_recurrence(gx, whh, bhn, hp, *, time_chunk=128):
    _, T, Bp, G3 = gx.shape
    tc = _choose_time_chunk(T, time_chunk)
    nc = T // tc

    def time_map(d, c):
        # forward core reads chunks 0..nc-1; backward core reads nc-1..0
        return (d, c + d * (nc - 1 - 2 * c), 0, 0)

    kernel = functools.partial(_bigru_kernel, hp=hp, tc=tc)
    return pl.pallas_call(
        kernel,
        out_shape=jax.ShapeDtypeStruct((2, T, Bp, hp), jnp.float32),
        grid=(2, nc),
        in_specs=[
            pl.BlockSpec((1, tc, Bp, G3), time_map),
            pl.BlockSpec((1, hp, G3), lambda d, c: (d, 0, 0)),
            pl.BlockSpec((1, 1, hp), lambda d, c: (d, 0, 0)),
        ],
        out_specs=pl.BlockSpec((1, tc, Bp, hp), time_map),
        scratch_shapes=[pltpu.VMEM((Bp, hp), jnp.float32)],
        compiler_params=pltpu.CompilerParams(
            dimension_semantics=("parallel", "arbitrary"),
            vmem_limit_bytes=_VMEM_LIMIT),
    )(gx, whh, bhn)


# ---------------------------------------------------------------------------
# Weight preparation: transpose, fold biases, pad each gate to Hp lanes.
# ---------------------------------------------------------------------------
def _pad_gate_cols(w_t, H, Hp):
    """w_t: (rows, 3H) -> (rows, 3Hp); each gate block zero-padded to Hp cols."""
    pad = ((0, 0), (0, Hp - H))
    return jnp.concatenate(
        [jnp.pad(w_t[:, i * H:(i + 1) * H], pad) for i in range(3)], axis=1)


def _pad_gate_vec(v, H, Hp):
    pad = (0, Hp - H)
    return jnp.concatenate(
        [jnp.pad(v[i * H:(i + 1) * H], pad) for i in range(3)])


def prepare_gru_weights(params, H):
    Hp = ((H + 127) // 128) * 128          # lane-align the hidden/gate dim
    w_ih_l, b_gx_l, whh_l, bhn_l = [], [], [], []
    for d in ("fwd", "bwd"):
        w_ih = params[f"w_ih_{d}"]         # (3H, D)
        w_hh = params[f"w_hh_{d}"]         # (3H, H)
        b_ih = params[f"b_ih_{d}"]         # (3H,)
        b_hh = params[f"b_hh_{d}"]         # (3H,)
        w_ih_l.append(_pad_gate_cols(w_ih.T, H, Hp))                  # (D, 3Hp)
        whh_l.append(jnp.pad(_pad_gate_cols(w_hh.T, H, Hp),
                             ((0, Hp - H), (0, 0))))                  # (Hp, 3Hp)
        # fold b_ih fully, and b_hh for the r,z gates, into the gx bias;
        # b_hn stays separate (it sits inside r * (W_hn h + b_hn)).
        bg = jnp.concatenate([b_ih[:2 * H] + b_hh[:2 * H], b_ih[2 * H:]])
        b_gx_l.append(_pad_gate_vec(bg, H, Hp))                       # (3Hp,)
        bhn_l.append(jnp.pad(b_hh[2 * H:], (0, Hp - H)))              # (Hp,)

    w_ih = jnp.stack(w_ih_l).astype(jnp.bfloat16)                     # (2, D, 3Hp)
    b_gx = jnp.stack(b_gx_l)[:, None, :]                              # (2, 1, 3Hp)
    whh = jnp.stack(whh_l).astype(jnp.bfloat16)                       # (2, Hp, 3Hp)
    bhn = jnp.stack(bhn_l)[:, None, :]                                # (2, 1, Hp)
    return w_ih, b_gx, whh, bhn, Hp


# ---------------------------------------------------------------------------
# Full module forward (batch_first=True)
# ---------------------------------------------------------------------------
def bidirectional_gru_forward(x, params, *, row_tile=1024, time_chunk=128):
    B, T, D = x.shape
    H = params["w_hh_fwd"].shape[1]        # w_hh is (3H, H)
    w_ih, b_gx, whh, bhn, Hp = prepare_gru_weights(params, H)

    # Pad batch to the f32 sublane quantum so every per-step load/store in the
    # recurrence is a dense (Bp, *) tile instead of a masked partial store.
    Bp = ((B + 7) // 8) * 8
    # TODO(synk): fold this time-major transpose (and the final output
    # transpose) into the neighbouring kernels / consumer to save one HBM
    # round trip of |x| and |out|.
    x_tm = jnp.transpose(x, (1, 0, 2))                        # (T, B, D)
    if Bp != B:
        x_tm = jnp.pad(x_tm, ((0, 0), (0, Bp - B), (0, 0)))
    x_rows = x_tm.reshape(T * Bp, D)

    # LN + GELU + fused input projection, per-direction bf16 gx
    gx = ln_gelu_proj(x_rows, params["ln_gamma"], params["ln_beta"],
                      w_ih, b_gx, row_tile=row_tile)          # (2, T*Bp, 3Hp)
    gx = gx.reshape(2, T, Bp, 3 * Hp)                         # free split

    # chunked, direction-parallel recurrence
    out = bigru_recurrence(gx, whh, bhn, Hp,
                           time_chunk=time_chunk)             # (2, T, Bp, Hp)

    out = jnp.transpose(out[:, :, :B, :H], (2, 1, 0, 3)).reshape(B, T, 2 * H)
    # Dropout: identity in eval/inference mode.
    return out


# ---------------------------------------------------------------------------
# Parameter init (matches nn.GRU's U(-1/sqrt(H), 1/sqrt(H)) init)
# ---------------------------------------------------------------------------
def init_params(key, rnn_dim, hidden_size):
    k = 1.0 / math.sqrt(hidden_size)
    keys = jax.random.split(key, 8)

    def u(kk, shape):
        return jax.random.uniform(kk, shape, jnp.float32, minval=-k, maxval=k)

    return {
        "ln_gamma": jnp.ones((rnn_dim,), jnp.float32),
        "ln_beta": jnp.zeros((rnn_dim,), jnp.float32),
        "w_ih_fwd": u(keys[0], (3 * hidden_size, rnn_dim)),
        "w_hh_fwd": u(keys[1], (3 * hidden_size, hidden_size)),
        "b_ih_fwd": u(keys[2], (3 * hidden_size,)),
        "b_hh_fwd": u(keys[3], (3 * hidden_size,)),
        "w_ih_bwd": u(keys[4], (3 * hidden_size, rnn_dim)),
        "w_hh_bwd": u(keys[5], (3 * hidden_size, hidden_size)),
        "b_ih_bwd": u(keys[6], (3 * hidden_size,)),
        "b_hh_bwd": u(keys[7], (3 * hidden_size,)),
    }


# ---------------------------------------------------------------------------
# Pure-JAX reference (f32 everywhere) for a correctness sanity check.
# ---------------------------------------------------------------------------
def _reference_forward(x, params):
    B, T, D = x.shape
    H = params["w_hh_fwd"].shape[1]
    mean = x.mean(-1, keepdims=True)
    var = ((x - mean) ** 2).mean(-1, keepdims=True)
    y = (x - mean) * lax.rsqrt(var + 1e-5) * params["ln_gamma"] + params["ln_beta"]
    y = 0.5 * y * (1.0 + lax.erf(y * _INV_SQRT2))
    y_tm = jnp.transpose(y, (1, 0, 2))                      # (T, B, D)

    def run(d, xs):
        w_ih, w_hh = params[f"w_ih_{d}"], params[f"w_hh_{d}"]
        b_ih, b_hh = params[f"b_ih_{d}"], params[f"b_hh_{d}"]

        def step(h, x_t):
            gi = x_t @ w_ih.T + b_ih
            gh = h @ w_hh.T + b_hh
            r = jax.nn.sigmoid(gi[:, :H] + gh[:, :H])
            z = jax.nn.sigmoid(gi[:, H:2 * H] + gh[:, H:2 * H])
            n = jnp.tanh(gi[:, 2 * H:] + r * gh[:, 2 * H:])
            h_new = (1.0 - z) * n + z * h
            return h_new, h_new

        _, outs = lax.scan(step, jnp.zeros((B, H), jnp.float32), xs)
        return outs                                          # (T, B, H)

    of = run("fwd", y_tm)
    ob = run("bwd", y_tm[::-1])[::-1]
    out = jnp.concatenate([of, ob], axis=-1)                 # (T, B, 2H)
    return jnp.transpose(out, (1, 0, 2))                     # (B, T, 2H)


if __name__ == "__main__":
    B, T, RNN_DIM, HIDDEN = 2, 8, 32, 32

    key = jax.random.PRNGKey(0)
    k_x, k_p = jax.random.split(key)
    x = jax.random.normal(k_x, (B, T, RNN_DIM), jnp.float32)
    params = init_params(k_p, RNN_DIM, HIDDEN)

    fwd = jax.jit(bidirectional_gru_forward)
    out = jax.block_until_ready(fwd(x, params))

    assert out.shape == (B, T, 2 * HIDDEN), out.shape
    assert bool(jnp.all(jnp.isfinite(out)))

    ref = _reference_forward(x, params)
    max_err = float(jnp.max(jnp.abs(out - ref)))
    assert max_err < 5e-2, f"mismatch vs reference: {max_err}"

    print("KERNEL_OK")
</pallas_src>

<mosaic_0001>
module attributes {stable_mosaic.version = 11 : i64} {
  func.func @_ln_gelu_proj_kernel(%arg0: i32, %arg1: memref<64x32xf32, #tpu.memory_space<vmem>>, %arg2: memref<1x32xf32, #tpu.memory_space<vmem>>, %arg3: memref<1x32xf32, #tpu.memory_space<vmem>>, %arg4: memref<2x32x384xbf16, #tpu.memory_space<vmem>>, %arg5: memref<2x1x384xf32, #tpu.memory_space<vmem>>, %arg6: memref<2x64x384xbf16, #tpu.memory_space<vmem>>) attributes {dimension_semantics = [#tpu.dimension_semantics<parallel>], iteration_bounds = array<i64: 1>, scalar_prefetch = 0 : i64, scratch_operands = 0 : i64, tpu.core_type = #tpu.core_type<tc>, window_params = [{transform_indices = @transform_0, window_bounds = array<i64: 64, 32>}, {pipeline_mode = #tpu.pipeline_mode<synchronous>, transform_indices = @transform_1, window_bounds = array<i64: 1, 32>}, {pipeline_mode = #tpu.pipeline_mode<synchronous>, transform_indices = @transform_2, window_bounds = array<i64: 1, 32>}, {pipeline_mode = #tpu.pipeline_mode<synchronous>, transform_indices = @transform_3, window_bounds = array<i64: 2, 32, 384>}, {pipeline_mode = #tpu.pipeline_mode<synchronous>, transform_indices = @transform_4, window_bounds = array<i64: 2, 1, 384>}, {transform_indices = @transform_5, window_bounds = array<i64: 2, 64, 384>}]} {
    %c0 = arith.constant 0 : index
    %c0_0 = arith.constant 0 : index
    %0 = vector.load %arg1[%c0, %c0_0] : memref<64x32xf32, #tpu.memory_space<vmem>>, vector<64x32xf32>
    %cst = arith.constant dense<0.000000e+00> : vector<64xf32>
    %1 = vector.multi_reduction <add>, %0, %cst [1] : vector<64x32xf32> to vector<64xf32>
    %2 = vector.shape_cast %1 : vector<64xf32> to vector<64x1xf32>
    %cst_1 = arith.constant 3.200000e+01 : f32
    %3 = vector.broadcast %cst_1 : f32 to vector<64x1xf32>
    %4 = arith.divf %2, %3 : vector<64x1xf32>
    %5 = vector.broadcast %4 : vector<64x1xf32> to vector<64x32xf32>
    %6 = arith.subf %0, %5 : vector<64x32xf32>
    %7 = arith.mulf %6, %6 : vector<64x32xf32>
    %cst_2 = arith.constant dense<0.000000e+00> : vector<64xf32>
    %8 = vector.multi_reduction <add>, %7, %cst_2 [1] : vector<64x32xf32> to vector<64xf32>
    %9 = vector.shape_cast %8 : vector<64xf32> to vector<64x1xf32>
    %cst_3 = arith.constant 3.200000e+01 : f32
    %10 = vector.broadcast %cst_3 : f32 to vector<64x1xf32>
    %11 = arith.divf %9, %10 : vector<64x1xf32>
    %12 = vector.broadcast %4 : vector<64x1xf32> to vector<64x32xf32>
    %13 = arith.subf %0, %12 : vector<64x32xf32>
    %cst_4 = arith.constant 9.99999974E-6 : f32
    %14 = vector.broadcast %cst_4 : f32 to vector<64x1xf32>
    %15 = arith.addf %11, %14 : vector<64x1xf32>
    %16 = math.rsqrt %15 : vector<64x1xf32>
    %17 = vector.broadcast %16 : vector<64x1xf32> to vector<64x32xf32>
    %18 = arith.mulf %13, %17 : vector<64x32xf32>
    %c0_5 = arith.constant 0 : index
    %c0_6 = arith.constant 0 : index
    %19 = vector.load %arg2[%c0_5, %c0_6] : memref<1x32xf32, #tpu.memory_space<vmem>>, vector<1x32xf32>
    %20 = vector.broadcast %19 : vector<1x32xf32> to vector<64x32xf32>
    %21 = arith.mulf %18, %20 : vector<64x32xf32>
    %c0_7 = arith.constant 0 : index
    %c0_8 = arith.constant 0 : index
    %22 = vector.load %arg3[%c0_7, %c0_8] : memref<1x32xf32, #tpu.memory_space<vmem>>, vector<1x32xf32>
    %23 = vector.broadcast %22 : vector<1x32xf32> to vector<64x32xf32>
    %24 = arith.addf %21, %23 : vector<64x32xf32>
    %cst_9 = arith.constant 5.000000e-01 : f32
    %25 = vector.broadcast %cst_9 : f32 to vector<64x32xf32>
    %26 = arith.mulf %25, %24 : vector<64x32xf32>
    %cst_10 = arith.constant 0.707106769 : f32
    %27 = vector.broadcast %cst_10 : f32 to vector<64x32xf32>
    %28 = arith.mulf %24, %27 : vector<64x32xf32>
    %29 = math.erf %28 : vector<64x32xf32>
    %cst_11 = arith.constant 1.000000e+00 : f32
    %30 = vector.broadcast %cst_11 : f32 to vector<64x32xf32>
    %31 = arith.addf %30, %29 : vector<64x32xf32>
    %32 = arith.mulf %26, %31 : vector<64x32xf32>
    %33 = arith.truncf %32 : vector<64x32xf32> to vector<64x32xbf16>
    %c0_12 = arith.constant 0 : index
    %c0_13 = arith.constant 0 : index
    %c0_14 = arith.constant 0 : index
    %34 = vector.load %arg4[%c0_12, %c0_13, %c0_14] : memref<2x32x384xbf16, #tpu.memory_space<vmem>>, vector<1x32x384xbf16>
    %35 = vector.shape_cast %34 : vector<1x32x384xbf16> to vector<32x384xbf16>
    %cst_15 = arith.constant dense<0.000000e+00> : vector<64x384xf32>
    %36 = tpu.matmul %33, %35, %cst_15 {dimension_numbers = #tpu.dot_dimension_numbers<[1], [0], [0], [1], [0, 0, 1, 1], [], []>} : vector<64x32xbf16>, vector<32x384xbf16>, vector<64x384xf32> -> vector<64x384xf32>
    %c0_16 = arith.constant 0 : index
    %c0_17 = arith.constant 0 : index
    %c0_18 = arith.constant 0 : index
    %37 = vector.load %arg5[%c0_16, %c0_17, %c0_18] : memref<2x1x384xf32, #tpu.memory_space<vmem>>, vector<1x1x384xf32>
    %38 = vector.shape_cast %37 : vector<1x1x384xf32> to vector<1x384xf32>
    %39 = vector.broadcast %38 : vector<1x384xf32> to vector<64x384xf32>
    %40 = arith.addf %36, %39 : vector<64x384xf32>
    %41 = arith.truncf %40 : vector<64x384xf32> to vector<64x384xbf16>
    %c0_19 = arith.constant 0 : index
    %c0_20 = arith.constant 0 : index
    %c0_21 = arith.constant 0 : index
    %42 = vector.load %arg6[%c0_19, %c0_20, %c0_21] : memref<2x64x384xbf16, #tpu.memory_space<vmem>>, vector<1x64x384xbf16>
    %43 = vector.shape_cast %42 : vector<1x64x384xbf16> to vector<64x384xbf16>
    %44 = vector.shape_cast %41 : vector<64x384xbf16> to vector<1x64x384xbf16>
    tpu.vector_store %arg6[%c0_19, %c0_20, %c0_21], %44 {strides = array<i32>} : memref<2x64x384xbf16, #tpu.memory_space<vmem>>, vector<1x64x384xbf16>,
    %c1 = arith.constant 1 : index
    %c0_22 = arith.constant 0 : index
    %c0_23 = arith.constant 0 : index
    %45 = vector.load %arg4[%c1, %c0_22, %c0_23] : memref<2x32x384xbf16, #tpu.memory_space<vmem>>, vector<1x32x384xbf16>
    %46 = vector.shape_cast %45 : vector<1x32x384xbf16> to vector<32x384xbf16>
    %cst_24 = arith.constant dense<0.000000e+00> : vector<64x384xf32>
    %47 = tpu.matmul %33, %46, %cst_24 {dimension_numbers = #tpu.dot_dimension_numbers<[1], [0], [0], [1], [0, 0, 1, 1], [], []>} : vector<64x32xbf16>, vector<32x384xbf16>, vector<64x384xf32> -> vector<64x384xf32>
    %c1_25 = arith.constant 1 : index
    %c0_26 = arith.constant 0 : index
    %c0_27 = arith.constant 0 : index
    %48 = vector.load %arg5[%c1_25, %c0_26, %c0_27] : memref<2x1x384xf32, #tpu.memory_space<vmem>>, vector<1x1x384xf32>
    %49 = vector.shape_cast %48 : vector<1x1x384xf32> to vector<1x384xf32>
    %50 = vector.broadcast %49 : vector<1x384xf32> to vector<64x384xf32>
    %51 = arith.addf %47, %50 : vector<64x384xf32>
    %52 = arith.truncf %51 : vector<64x384xf32> to vector<64x384xbf16>
    %c1_28 = arith.constant 1 : index
    %c0_29 = arith.constant 0 : index
    %c0_30 = arith.constant 0 : index
    %53 = vector.load %arg6[%c1_28, %c0_29, %c0_30] : memref<2x64x384xbf16, #tpu.memory_space<vmem>>, vector<1x64x384xbf16>
    %54 = vector.shape_cast %53 : vector<1x64x384xbf16> to vector<64x384xbf16>
    %55 = vector.shape_cast %52 : vector<64x384xbf16> to vector<1x64x384xbf16>
    tpu.vector_store %arg6[%c1_28, %c0_29, %c0_30], %55 {strides = array<i32>} : memref<2x64x384xbf16, #tpu.memory_space<vmem>>, vector<1x64x384xbf16>,
    return
  }
  func.func @transform_0(%arg0: i32) -> (i32, i32) {
    %c0_i32 = arith.constant 0 : i32
    %c0_i32_0 = arith.constant 0 : i32
    return %arg0, %c0_i32 : i32, i32
  }
  func.func @transform_1(%arg0: i32) -> (i32, i32) {
    %c0_i32 = arith.constant 0 : i32
    %c0_i32_0 = arith.constant 0 : i32
    %c0_i32_1 = arith.constant 0 : i32
    return %c0_i32, %c0_i32_0 : i32, i32
  }
  func.func @transform_2(%arg0: i32) -> (i32, i32) {
    %c0_i32 = arith.constant 0 : i32
    %c0_i32_0 = arith.constant 0 : i32
    %c0_i32_1 = arith.constant 0 : i32
    return %c0_i32, %c0_i32_0 : i32, i32
  }
  func.func @transform_3(%arg0: i32) -> (i32, i32, i32) {
    %c0_i32 = arith.constant 0 : i32
    %c0_i32_0 = arith.constant 0 : i32
    %c0_i32_1 = arith.constant 0 : i32
    %c0_i32_2 = arith.constant 0 : i32
    return %c0_i32, %c0_i32_0, %c0_i32_1 : i32, i32, i32
  }
  func.func @transform_4(%arg0: i32) -> (i32, i32, i32) {
    %c0_i32 = arith.constant 0 : i32
    %c0_i32_0 = arith.constant 0 : i32
    %c0_i32_1 = arith.constant 0 : i32
    %c0_i32_2 = arith.constant 0 : i32
    return %c0_i32, %c0_i32_0, %c0_i32_1 : i32, i32, i32
  }
  func.func @transform_5(%arg0: i32) -> (i32, i32, i32) {
    %c0_i32 = arith.constant 0 : i32
    %c0_i32_0 = arith.constant 0 : i32
    %c0_i32_1 = arith.constant 0 : i32
    return %c0_i32, %arg0, %c0_i32_0 : i32, i32, i32
  }
}

module attributes {stable_mosaic.version = 11 : i64} {
  func.func @_bigru_kernel(%arg0: i32, %arg1: i32, %arg2: memref<1x8x8x384xbf16, #tpu.memory_space<vmem>>, %arg3: memref<1x128x384xbf16, #tpu.memory_space<vmem>>, %arg4: memref<1x1x128xf32, #tpu.memory_space<vmem>>, %arg5: memref<1x8x8x128xf32, #tpu.memory_space<vmem>>, %arg6: memref<8x128xf32, #tpu.memory_space<vmem>>) attributes {dimension_semantics = [#tpu.dimension_semantics<parallel>, #tpu.dimension_semantics<arbitrary>], iteration_bounds = array<i64: 2, 1>, scalar_prefetch = 0 : i64, scratch_operands = 1 : i64, tpu.core_type = #tpu.core_type<tc>, window_params = [{transform_indices = @transform_0, window_bounds = array<i64: 1, 8, 8, 384>}, {transform_indices = @transform_1, window_bounds = array<i64: 1, 128, 384>}, {transform_indices = @transform_2, window_bounds = array<i64: 1, 1, 128>}, {transform_indices = @transform_3, window_bounds = array<i64: 1, 8, 8, 128>}]} {
    %c0_i32 = arith.constant 0 : i32
    %0 = arith.cmpi eq, %arg1, %c0_i32 : i32
    %1 = arith.extui %0 : i1 to i32
    %c0_i32_0 = arith.constant 0 : i32
    %2 = arith.cmpi ne, %1, %c0_i32_0 : i32
    scf.if %2 {
      %cst = arith.constant 0.000000e+00 : f32
      %13 = vector.broadcast %cst : f32 to vector<8x128xf32>
      %c0_12 = arith.constant 0 : index
      %c0_13 = arith.constant 0 : index
      %14 = vector.load %arg6[%c0_12, %c0_13] : memref<8x128xf32, #tpu.memory_space<vmem>>, vector<8x128xf32>
      tpu.vector_store %arg6[%c0_12, %c0_13], %13 {strides = array<i32>} : memref<8x128xf32, #tpu.memory_space<vmem>>, vector<8x128xf32>,
    } else {
    }
    %c0 = arith.constant 0 : index
    %c0_1 = arith.constant 0 : index
    %c0_2 = arith.constant 0 : index
    %3 = vector.load %arg3[%c0, %c0_1, %c0_2] : memref<1x128x384xbf16, #tpu.memory_space<vmem>>, vector<1x128x384xbf16>
    %4 = vector.shape_cast %3 : vector<1x128x384xbf16> to vector<128x384xbf16>
    %c0_3 = arith.constant 0 : index
    %c0_4 = arith.constant 0 : index
    %c0_5 = arith.constant 0 : index
    %5 = vector.load %arg4[%c0_3, %c0_4, %c0_5] : memref<1x1x128xf32, #tpu.memory_space<vmem>>, vector<1x1x128xf32>
    %6 = vector.shape_cast %5 : vector<1x1x128xf32> to vector<1x128xf32>
    %7 = vector.shape_cast %6 : vector<1x128xf32> to vector<1x128xf32>
    %8 = vector.broadcast %7 : vector<1x128xf32> to vector<8x128xf32>
    %c0_6 = arith.constant 0 : index
    %c0_7 = arith.constant 0 : index
    %9 = vector.load %arg6[%c0_6, %c0_7] : memref<8x128xf32, #tpu.memory_space<vmem>>, vector<8x128xf32>
    %c0_i32_8 = arith.constant 0 : i32
    %c8_i32 = arith.constant 8 : i32
    %10 = arith.addi %c0_i32_8, %c8_i32 : i32
    %c1_i32 = arith.constant 1 : i32
    %11 = scf.for %arg7 = %c0_i32_8 to %10 step %c1_i32 iter_args(%arg8 = %9) -> (vector<8x128xf32>)  : i32 {
      %c2_i32 = arith.constant 2 : i32
      %13 = arith.muli %c2_i32, %arg7 : i32
      %c7_i32 = arith.constant 7 : i32
      %14 = arith.subi %c7_i32, %13 : i32
      %15 = arith.muli %arg0, %14 : i32
      %16 = arith.addi %arg7, %15 : i32
      %c0_12 = arith.constant 0 : index
      %17 = arith.index_cast %16 : i32 to index
      %c0_13 = arith.constant 0 : index
      %c0_14 = arith.constant 0 : index
      %18 = vector.load %arg2[%c0_12, %17, %c0_13, %c0_14] : memref<1x8x8x384xbf16, #tpu.memory_space<vmem>>, vector<1x1x8x384xbf16>
      %19 = vector.shape_cast %18 : vector<1x1x8x384xbf16> to vector<8x384xbf16>
      %20 = arith.extf %19 : vector<8x384xbf16> to vector<8x384xf32>
      %21 = arith.truncf %arg8 : vector<8x128xf32> to vector<8x128xbf16>
      %cst = arith.constant dense<0.000000e+00> : vector<8x384xf32>
      %22 = tpu.matmul %21, %4, %cst {dimension_numbers = #tpu.dot_dimension_numbers<[1], [0], [0], [1], [0, 0, 1, 1], [], []>} : vector<8x128xbf16>, vector<128x384xbf16>, vector<8x384xf32> -> vector<8x384xf32>
      %23 = vector.extract_strided_slice %20 {offsets = [0, 0], sizes = [8, 128], strides = [1, 1]} : vector<8x384xf32> to vector<8x128xf32>
      %24 = vector.extract_strided_slice %22 {offsets = [0, 0], sizes = [8, 128], strides = [1, 1]} : vector<8x384xf32> to vector<8x128xf32>
      %25 = arith.addf %23, %24 : vector<8x128xf32>
      %26 = arith.negf %25 : vector<8x128xf32>
      %27 = math.exp %26 : vector<8x128xf32>
      %cst_15 = arith.constant 1.000000e+00 : f32
      %28 = vector.broadcast %cst_15 : f32 to vector<8x128xf32>
      %29 = arith.addf %28, %27 : vector<8x128xf32>
      %30 = arith.divf %28, %29 : vector<8x128xf32>
      %31 = vector.extract_strided_slice %20 {offsets = [0, 128], sizes = [8, 128], strides = [1, 1]} : vector<8x384xf32> to vector<8x128xf32>
      %32 = vector.extract_strided_slice %22 {offsets = [0, 128], sizes = [8, 128], strides = [1, 1]} : vector<8x384xf32> to vector<8x128xf32>
      %33 = arith.addf %31, %32 : vector<8x128xf32>
      %34 = arith.negf %33 : vector<8x128xf32>
      %35 = math.exp %34 : vector<8x128xf32>
      %cst_16 = arith.constant 1.000000e+00 : f32
      %36 = vector.broadcast %cst_16 : f32 to vector<8x128xf32>
      %37 = arith.addf %36, %35 : vector<8x128xf32>
      %38 = arith.divf %36, %37 : vector<8x128xf32>
      %39 = vector.extract_strided_slice %20 {offsets = [0, 256], sizes = [8, 128], strides = [1, 1]} : vector<8x384xf32> to vector<8x128xf32>
      %40 = vector.extract_strided_slice %22 {offsets = [0, 256], sizes = [8, 128], strides = [1, 1]} : vector<8x384xf32> to vector<8x128xf32>
      %41 = arith.addf %40, %8 : vector<8x128xf32>
      %42 = arith.mulf %30, %41 : vector<8x128xf32>
      %43 = arith.addf %39, %42 : vector<8x128xf32>
      %44 = math.tanh %43 : vector<8x128xf32>
      %cst_17 = arith.constant 1.000000e+00 : f32
      %45 = vector.broadcast %cst_17 : f32 to vector<8x128xf32>
      %46 = arith.subf %45, %38 : vector<8x128xf32>
      %47 = arith.mulf %46, %44 : vector<8x128xf32>
      %48 = arith.mulf %38, %arg8 : vector<8x128xf32>
      %49 = arith.addf %47, %48 : vector<8x128xf32>
      %c0_18 = arith.constant 0 : index
      %50 = arith.index_cast %16 : i32 to index
      %c0_19 = arith.constant 0 : index
      %c0_20 = arith.constant 0 : index
      %51 = vector.load %arg5[%c0_18, %50, %c0_19, %c0_20] : memref<1x8x8x128xf32, #tpu.memory_space<vmem>>, vector<1x1x8x128xf32>
      %52 = vector.shape_cast %51 : vector<1x1x8x128xf32> to vector<8x128xf32>
      %53 = vector.shape_cast %49 : vector<8x128xf32> to vector<1x1x8x128xf32>
      tpu.vector_store %arg5[%c0_18, %50, %c0_19, %c0_20], %53 {strides = array<i32>} : memref<1x8x8x128xf32, #tpu.memory_space<vmem>>, vector<1x1x8x128xf32>,
      scf.yield %49 : vector<8x128xf32>
    }
    %c8_i32_9 = arith.constant 8 : i32
    %c0_10 = arith.constant 0 : index
    %c0_11 = arith.constant 0 : index
    %12 = vector.load %arg6[%c0_10, %c0_11] : memref<8x128xf32, #tpu.memory_space<vmem>>, vector<8x128xf32>
    tpu.vector_store %arg6[%c0_10, %c0_11], %11 {strides = array<i32>} : memref<8x128xf32, #tpu.memory_space<vmem>>, vector<8x128xf32>,
    return
  }
  func.func @transform_0(%arg0: i32, %arg1: i32) -> (i32, i32, i32, i32) {
    %c2_i32 = arith.constant 2 : i32
    %0 = arith.muli %c2_i32, %arg1 : i32
    %c0_i32 = arith.constant 0 : i32
    %1 = arith.subi %c0_i32, %0 : i32
    %2 = arith.muli %arg0, %1 : i32
    %3 = arith.addi %arg1, %2 : i32
    %c0_i32_0 = arith.constant 0 : i32
    %c0_i32_1 = arith.constant 0 : i32
    %c0_i32_2 = arith.constant 0 : i32
    return %arg0, %3, %c0_i32_0, %c0_i32_1 : i32, i32, i32, i32
  }
  func.func @transform_1(%arg0: i32, %arg1: i32) -> (i32, i32, i32) {
    %c0_i32 = arith.constant 0 : i32
    %c0_i32_0 = arith.constant 0 : i32
    %c0_i32_1 = arith.constant 0 : i32
    return %arg0, %c0_i32, %c0_i32_0 : i32, i32, i32
  }
  func.func @transform_2(%arg0: i32, %arg1: i32) -> (i32, i32, i32) {
    %c0_i32 = arith.constant 0 : i32
    %c0_i32_0 = arith.constant 0 : i32
    %c0_i32_1 = arith.constant 0 : i32
    return %arg0, %c0_i32, %c0_i32_0 : i32, i32, i32
  }
  func.func @transform_3(%arg0: i32, %arg1: i32) -> (i32, i32, i32, i32) {
    %c2_i32 = arith.constant 2 : i32
    %0 = arith.muli %c2_i32, %arg1 : i32
    %c0_i32 = arith.constant 0 : i32
    %1 = arith.subi %c0_i32, %0 : i32
    %2 = arith.muli %arg0, %1 : i32
    %3 = arith.addi %arg1, %2 : i32
    %c0_i32_0 = arith.constant 0 : i32
    %c0_i32_1 = arith.constant 0 : i32
    %c0_i32_2 = arith.constant 0 : i32
    return %arg0, %3, %c0_i32_0, %c0_i32_1 : i32, i32, i32, i32
  }
}

</mosaic_0001>

<llo_original>
// kernel: bidirectional_gru_forward.3
$region0: #{bidirectional_gru_forward.3}
  #allocation0 [shape = 'u32[]', space=smem, size = 0x4, offset = 0x4, fixed_abs, tag = 'smem constant byte address 0x4 - core index']
  #allocation1 [shape = 'u32[144,128]{1,0:T(1,128)}', space=vmem, size = 0x12000, scoped, tag = 'internal scratch']
  #allocation2 [shape = 'f32[8,128]{1,0:T(8,128)}', space=vmem, size = 0x1000, scoped, tag = 'scratch operand']
  %s0 = inlined_call_operand.vmem [shape: bf16[2,8,8,384], index: 0, kind: input, shape index: {}]
  %s1 = inlined_call_operand.vmem [shape: bf16[2,128,384], index: 1, kind: input, shape index: {}]
  %s2 = inlined_call_operand.vmem [shape: f32[2,1,128], index: 2, kind: input, shape index: {}]
  %s3 = inlined_call_operand.vmem [shape: f32[2,8,8,128], index: 3, kind: output, shape index: {}]
  %s4 = sld [smem:[#allocation0]]
  $region56: #{bidirectional_gru_forward.3} parent=0
    _
  %s6 = ssub.s32 1, %s4
  %s7 = scalar_select 0, %s6, %s4
  loop: start=0, step=1, limit=4
  $region2: #{bidirectional_gru_forward.3} parent=0 // loop_pre_header
    _
  $region3: #{bidirectional_gru_forward.3} parent=0 // loop_header
    %s9 = sphi 0, %s13
    %p10 = scmp.ge.s32.totalorder %s9, 4
    %s16 = sphi 0, %s28
    %s17 = sphi 0, %s24
    %s18 = sphi 0, %s16
    %s19 = sphi 0, %s17
    %s20 = sphi 0, %s18
    %s21 = sphi 0, %s19
    %s41 = sphi 0, %s43
    %s44 = sphi 0, %s41
    %s45 = sphi 0, %s44
    %s61 = sphi 0, %s45
    %s67 = sphi 0, %s69
    %s70 = sphi 0, %s67
    %s71 = sphi 0, %s70
    %s87 = sphi 0, %s71
    %s93 = sphi 0, %s95
    %s96 = sphi 0, %s93
    %s97 = sphi 0, %s96
    %s113 = sphi 0, %s97
    %s129 = sphi 0, %s131
    %s132 = sphi 0, %s129
    %s133 = sphi 0, %s132
    %s149 = sphi 0, %s133
  $region4: #{bidirectional_gru_forward.3} parent=0 // loop_header_branch
    %12 = sbr.rel (%p10) target = $region8
  $region5: #{bidirectional_gru_forward.3} parent=0 // loop_body
    %s14 = ssub.s32 %s9, 1
    %s15 = ssub.s32 %s9, 2
    %s22 = sadd.s32 1, %s17
    %p23 = scmp.ge.s32.totalorder %s22, 1
    %s24 = scalar_select %p23, 0, %s22
    %s25 = sadd.s32 1, %s16
    %s26 = scalar_select %p23, %s25, %s16
    %p27 = scmp.ge.s32.totalorder %s26, 2
    %s28 = scalar_select %p27, 0, %s26
    %s29 = smul.u32 %s17, 2
    %s30 = ssub.s32 0, %s29
    %s31 = smul.u32 %s16, %s30
    %s32 = sadd.s32 %s17, %s31
    %s33 = smul.u32 %s24, 2
    %s34 = ssub.s32 0, %s33
    %s35 = smul.u32 %s28, %s34
    %s36 = sadd.s32 %s24, %s35
    %s37 = ssub.s32 %s16, %s28
    %s38 = ssub.s32 %s32, %s36
    %s39 = sor.u32 %s37, %s38
    %p40 = scmp.eq.s32.totalorder %s39, 0
    %s42 = sadd.s32 %s41, 1
    %s43 = scalar_select %p40, %s41, %s42
    %p46 = pneg %p40
    %p47 = scmp.eq.s32.totalorder %s9, 1
    %p48 = por %p46, %p47
    %p49 = scmp.ne.s32.totalorder %s41, %s44
    %p50 = scmp.eq.s32.totalorder %s9, 0
    %p51 = por %p49, %p50
    %p52 = scmp.ne.s32.totalorder %s41, %s44
    %p53 = scmp.eq.s32.totalorder %s14, 1
    %p54 = por %p52, %p53
    %p55 = scmp.ne.s32.totalorder %s44, %s45
    %p56 = scmp.eq.s32.totalorder %s14, 0
    %p57 = por %p55, %p56
    %p58 = scmp.ne.s32.totalorder %s44, %s45
    %p59 = scmp.eq.s32.totalorder %s15, 1
    %p60 = por %p58, %p59
    %p62 = scmp.ne.s32.totalorder %s45, %s61
    %p63 = scmp.eq.s32.totalorder %s15, 0
    %p64 = por %p62, %p63
    %s65 = ssub.s32 %s16, %s28
    %p66 = scmp.eq.s32.totalorder %s65, 0
    %s68 = sadd.s32 %s67, 1
    %s69 = scalar_select %p66, %s67, %s68
    %p72 = pneg %p66
    %p73 = scmp.eq.s32.totalorder %s9, 1
    %p74 = por %p72, %p73
    %p75 = scmp.ne.s32.totalorder %s67, %s70
    %p76 = scmp.eq.s32.totalorder %s9, 0
    %p77 = por %p75, %p76
    %p78 = scmp.ne.s32.totalorder %s67, %s70
    %p79 = scmp.eq.s32.totalorder %s14, 1
    %p80 = por %p78, %p79
    %p81 = scmp.ne.s32.totalorder %s70, %s71
    %p82 = scmp.eq.s32.totalorder %s14, 0
    %p83 = por %p81, %p82
    %p84 = scmp.ne.s32.totalorder %s70, %s71
    %p85 = scmp.eq.s32.totalorder %s15, 1
    %p86 = por %p84, %p85
    %p88 = scmp.ne.s32.totalorder %s71, %s87
    %p89 = scmp.eq.s32.totalorder %s15, 0
    %p90 = por %p88, %p89
    %s91 = ssub.s32 %s16, %s28
    %p92 = scmp.eq.s32.totalorder %s91, 0
    %s94 = sadd.s32 %s93, 1
    %s95 = scalar_select %p92, %s93, %s94
    %p98 = pneg %p92
    %p99 = scmp.eq.s32.totalorder %s9, 1
    %p100 = por %p98, %p99
    %p101 = scmp.ne.s32.totalorder %s93, %s96
    %p102 = scmp.eq.s32.totalorder %s9, 0
    %p103 = por %p101, %p102
    %p104 = scmp.ne.s32.totalorder %s93, %s96
    %p105 = scmp.eq.s32.totalorder %s14, 1
    %p106 = por %p104, %p105
    %p107 = scmp.ne.s32.totalorder %s96, %s97
    %p108 = scmp.eq.s32.totalorder %s14, 0
    %p109 = por %p107, %p108
    %p110 = scmp.ne.s32.totalorder %s96, %s97
    %p111 = scmp.eq.s32.totalorder %s15, 1
    %p112 = por %p110, %p111
    %p114 = scmp.ne.s32.totalorder %s97, %s113
    %p115 = scmp.eq.s32.totalorder %s15, 0
    %p116 = por %p114, %p115
    %s117 = smul.u32 %s17, 2
    %s118 = ssub.s32 0, %s117
    %s119 = smul.u32 %s16, %s118
    %s120 = sadd.s32 %s17, %s119
    %s121 = smul.u32 %s24, 2
    %s122 = ssub.s32 0, %s121
    %s123 = smul.u32 %s28, %s122
    %s124 = sadd.s32 %s24, %s123
    %s125 = ssub.s32 %s16, %s28
    %s126 = ssub.s32 %s120, %s124
    %s127 = sor.u32 %s125, %s126
    %p128 = scmp.eq.s32.totalorder %s127, 0
    %s130 = sadd.s32 %s129, 1
    %s131 = scalar_select %p128, %s129, %s130
    %p134 = pneg %p128
    %p135 = scmp.eq.s32.totalorder %s9, 1
    %p136 = por %p134, %p135
    %p137 = scmp.ne.s32.totalorder %s129, %s132
    %p138 = scmp.eq.s32.totalorder %s9, 0
    %p139 = por %p137, %p138
    %p140 = scmp.ne.s32.totalorder %s129, %s132
    %p141 = scmp.eq.s32.totalorder %s14, 1
    %p142 = por %p140, %p141
    %p143 = scmp.ne.s32.totalorder %s132, %s133
    %p144 = scmp.eq.s32.totalorder %s14, 0
    %p145 = por %p143, %p144
    %p146 = scmp.ne.s32.totalorder %s132, %s133
    %p147 = scmp.eq.s32.totalorder %s15, 1
    %p148 = por %p146, %p147
    %p150 = scmp.ne.s32.totalorder %s133, %s149
    %p151 = scmp.eq.s32.totalorder %s15, 0
    %p152 = por %p150, %p151
    %p153 = scmp.le.s32.totalorder 1, %s9
    %p154 = scmp.lt.s32.totalorder %s9, 3
    %p155 = pnand %p153, %p154
    %p156 = pneg %p155
    // Predicated region
    $region9: #{bidirectional_gru_forward.3} parent=5 // pred_check
      _
    $region10: #{bidirectional_gru_forward.3} parent=5 // pred_check_branch
      %158 = sbr.rel (%p155) target = $region12
    $region11: #{bidirectional_gru_forward.3} parent=5 // pred_region
      %s159 = ssub.s32 %s9, 1
    $region12: #{bidirectional_gru_forward.3} parent=5 // pred_fallthru
      _
    %p160 = scmp.lt.s32.totalorder %s9, 2
    // Predicated region
    $region13: #{bidirectional_gru_forward.3} parent=5 // pred_check
      %p161 = pneg %p160
    $region14: #{bidirectional_gru_forward.3} parent=5 // pred_check_branch
      %163 = sbr.rel (%p161) target = $region16
    $region15: #{bidirectional_gru_forward.3} parent=5 // pred_region
      // Predicated region
      $region17: #{bidirectional_gru_forward.3} parent=15 // pred_check
        %p164 = pneg %p51
      $region18: #{bidirectional_gru_forward.3} parent=15 // pred_check_branch
        %166 = sbr.rel (%p164) target = $region20
      $region19: #{bidirectional_gru_forward.3} parent=15 // pred_region
        %s167 = smul.u32 %s17, 2
        %s168 = ssub.s32 0, %s167
        %s169 = smul.u32 %s16, %s168
        %s170 = sadd.s32 %s17, %s169
        %s171 = smul.u32 8, %s170
        %p172 = scmp.lt.s32.totalorder %s16, 1
        %s173 = scalar_select %p172, %s16, 1
        %p174 = scmp.lt.s32.totalorder %s171, 7
        %s175 = scalar_select %p174, %s171, 7
        %s176 = smul.addr %s175, 3
        %s177 = smul.addr %s173, 24
        %s178 = sadd.s32 %s176, %s177
        %s179 = smul.addr %s178, 4
        %s180 = scalar_lea.vmem %s0, %s179
        %s181 = smul.u32 %s17, 2
        %s182 = ssub.s32 0, %s181
        %s183 = smul.u32 %s16, %s182
        %s184 = sadd.s32 %s17, %s183
        %s185 = smul.u32 8, %s184
      $region20: #{bidirectional_gru_forward.3} parent=15 // pred_fallthru
        _
      // Predicated region
      $region21: #{bidirectional_gru_forward.3} parent=15 // pred_check
        %p186 = pneg %p77
      $region22: #{bidirectional_gru_forward.3} parent=15 // pred_check_branch
        %188 = sbr.rel (%p186) target = $region24
      $region23: #{bidirectional_gru_forward.3} parent=15 // pred_region
        %p189 = scmp.lt.s32.totalorder %s16, 1
        %s190 = scalar_select %p189, %s16, 1
        %s191 = smul.addr %s190, 48
        %s192 = smul.addr %s191, 4
        %s193 = scalar_lea.vmem %s1, %s192
      $region24: #{bidirectional_gru_forward.3} parent=15 // pred_fallthru
        _
      // Predicated region
      $region25: #{bidirectional_gru_forward.3} parent=15 // pred_check
        %p194 = pneg %p103
      $region26: #{bidirectional_gru_forward.3} parent=15 // pred_check_branch
        %196 = sbr.rel (%p194) target = $region28
      $region27: #{bidirectional_gru_forward.3} parent=15 // pred_region
        %p197 = scmp.lt.s32.totalorder %s16, 1
        %s198 = scalar_select %p197, %s16, 1
        %s199 = scalar_lea.vmem %s2, %s198
      $region28: #{bidirectional_gru_forward.3} parent=15 // pred_fallthru
        _
    $region16: #{bidirectional_gru_forward.3} parent=5 // pred_fallthru
      _
    %p200 = scmp.le.s32.totalorder 1, %s9
    %p201 = scmp.lt.s32.totalorder %s9, 3
    %p202 = pnand %p200, %p201
    %p203 = pneg %p202
    // Predicated region
    $region29: #{bidirectional_gru_forward.3} parent=5 // pred_check
      _
    $region30: #{bidirectional_gru_forward.3} parent=5 // pred_check_branch
      %205 = sbr.rel (%p202) target = $region32
    $region31: #{bidirectional_gru_forward.3} parent=5 // pred_region
      %s206 = ssub.s32 %s9, 1
      %s207 = smul.u32 %s19, 2
      %s208 = ssub.s32 0, %s207
      %s209 = smul.u32 %s18, %s208
      %s210 = sadd.s32 %s19, %s209
      %s211 = smul.u32 8, %s210
      %p212 = scmp.lt.s32.totalorder %s18, 1
      %s213 = scalar_select %p212, %s18, 1
      %p214 = scmp.lt.s32.totalorder %s211, 7
      %s215 = scalar_select %p214, %s211, 7
      %s216 = smul.addr %s215, 3
      %s217 = smul.addr %s213, 24
      %s218 = sadd.s32 %s216, %s217
      %s219 = smul.addr %s218, 4
      %s220 = scalar_lea.vmem %s0, %s219
      %p221 = pneg %p57
      %p222 = pneg %p54
      %p223 = scmp.lt.s32.totalorder %s18, 1
      %s224 = scalar_select %p223, %s18, 1
      %s225 = smul.addr %s224, 48
      %s226 = smul.addr %s225, 4
      %s227 = scalar_lea.vmem %s1, %s226
      %p228 = pneg %p83
      %p229 = pneg %p80
      %p230 = scmp.lt.s32.totalorder %s18, 1
      %s231 = scalar_select %p230, %s18, 1
      %s232 = scalar_lea.vmem %s2, %s231
      %p233 = pneg %p109
      %p234 = pneg %p106
      %p235 = pneg %p145
      %p236 = pneg %p142
      %s237 = smul.u32 %s19, 2
      %s238 = ssub.s32 0, %s237
      %s239 = smul.u32 %s18, %s238
      %s240 = sadd.s32 %s19, %s239
      %s241 = smul.u32 8, %s240
      %p242 = scmp.lt.s32.totalorder %s18, 1
      %s243 = scalar_select %p242, %s18, 1
      %p244 = scmp.lt.s32.totalorder %s241, 7
      %s245 = scalar_select %p244, %s241, 7
      %s246 = smul.addr %s243, 8
      %s247 = sadd.s32 %s245, %s246
      %s248 = smul.addr %s247, 8
      %s249 = scalar_lea.vmem %s3, %s248
      %s250 = smul.u32 %s19, 2
      %s251 = ssub.s32 0, %s250
      %s252 = smul.u32 %s18, %s251
      %s253 = sadd.s32 %s19, %s252
      %s254 = smul.u32 8, %s253
      %p255 = scmp.lt.s32.totalorder %s18, 1
      %s256 = scalar_select %p255, %s18, 1
      %p257 = scmp.lt.s32.totalorder %s254, 7
      %s258 = scalar_select %p257, %s254, 7
      %s259 = smul.addr %s258, 3
      %s260 = smul.addr %s256, 24
      %s261 = sadd.s32 %s259, %s260
      %s262 = smul.addr %s261, 4
      %s263 = scalar_lea.vmem %s0, %s262
      %s264 = smul.u32 %s19, 2
      %s265 = ssub.s32 0, %s264
      %s266 = smul.u32 %s18, %s265
      %s267 = sadd.s32 %s19, %s266
      %s268 = smul.u32 8, %s267
      %p269 = scmp.lt.s32.totalorder %s18, 1
      %s270 = scalar_select %p269, %s18, 1
      %s271 = smul.addr %s270, 48
      %s272 = smul.addr %s271, 4
      %s273 = scalar_lea.vmem %s1, %s272
      %p274 = scmp.lt.s32.totalorder %s18, 1
      %s275 = scalar_select %p274, %s18, 1
      %s276 = scalar_lea.vmem %s2, %s275
      %s277 = smul.u32 %s19, 2
      %s278 = ssub.s32 0, %s277
      %s279 = smul.u32 %s18, %s278
      %s280 = sadd.s32 %s19, %s279
      %s281 = smul.u32 8, %s280
      %p282 = scmp.lt.s32.totalorder %s18, 1
      %s283 = scalar_select %p282, %s18, 1
      %p284 = scmp.lt.s32.totalorder %s281, 7
      %s285 = scalar_select %p284, %s281, 7
      %s286 = smul.addr %s283, 8
      %s287 = sadd.s32 %s285, %s286
      %s288 = smul.addr %s287, 8
      %s289 = scalar_lea.vmem %s3, %s288
      %s290 = smul.u32 %s19, 2
      %s291 = ssub.s32 0, %s290
      %s292 = smul.u32 %s18, %s291
      %s293 = sadd.s32 %s19, %s292
      %s294 = smul.u32 8, %s293
      %p296 = scmp.eq.s32.totalorder %s19, 0
      // Predicated region
      $region33: #{bidirectional_gru_forward.3} parent=31 // pred_check
        %p297 = pneg %p296
      $region34: #{bidirectional_gru_forward.3} parent=31 // pred_check_branch
        %299 = sbr.rel (%p297) target = $region36
      $region35: #{bidirectional_gru_forward.3} parent=31 // pred_region
        %300 = vst [vmem:[#allocation2] sm:$0xff] 0.0
      $region36: #{bidirectional_gru_forward.3} parent=31 // pred_fallthru
        _
      %v301 = vld [vmem:[%s273] sm:$0xff]
      %v302 = vld [vmem:[%s273 + $0x8] sm:$0xf]
      %v303 = vld [vmem:[%s273 + $0xc] sm:$0xff]
      %v304 = vld [vmem:[%s273 + $0x14] sm:$0xf]
      %v305 = vld [vmem:[%s273 + $0x18] sm:$0xff]
      %v306 = vld [vmem:[%s273 + $0x20] sm:$0xf]
      %v307 = vld [vmem:[%s273 + $0x24] sm:$0xff]
      %v308 = vld [vmem:[%s273 + $0x2c] sm:$0xf]
      %v309 = vld [vmem:[%s273 + $0x30] sm:$0xff]
      %v310 = vld [vmem:[%s273 + $0x38] sm:$0xf]
      %v311 = vld [vmem:[%s273 + $0x3c] sm:$0xff]
      %v312 = vld [vmem:[%s273 + $0x44] sm:$0xf]
      %v313 = vld [vmem:[%s273 + $0x48] sm:$0xff]
      %v314 = vld [vmem:[%s273 + $0x50] sm:$0xf]
      %v315 = vld [vmem:[%s273 + $0x54] sm:$0xff]
      %v316 = vld [vmem:[%s273 + $0x5c] sm:$0xf]
      %v317 = vld [vmem:[%s273 + $0x60] sm:$0xff]
      %v318 = vld [vmem:[%s273 + $0x68] sm:$0xf]
      %v319 = vld [vmem:[%s273 + $0x6c] sm:$0xff]
      %v320 = vld [vmem:[%s273 + $0x74] sm:$0xf]
      %v321 = vld [vmem:[%s273 + $0x78] sm:$0xff]
      %v322 = vld [vmem:[%s273 + $0x80] sm:$0xf]
      %v323 = vld [vmem:[%s273 + $0x84] sm:$0xff]
      %v324 = vld [vmem:[%s273 + $0x8c] sm:$0xf]
      %v325 = vld [vmem:[%s273 + $0x90] sm:$0xff]
      %v326 = vld [vmem:[%s273 + $0x98] sm:$0xf]
      %v327 = vld [vmem:[%s273 + $0x9c] sm:$0xff]
      %v328 = vld [vmem:[%s273 + $0xa4] sm:$0xf]
      %v329 = vld [vmem:[%s273 + $0xa8] sm:$0xff]
      %v330 = vld [vmem:[%s273 + $0xb0] sm:$0xf]
      %v331 = vld [vmem:[%s273 + $0xb4] sm:$0xff]
      %v332 = vld [vmem:[%s273 + $0xbc] sm:$0xf]
      %v333 = vld [vmem:[%s276] sm:$0x1]
      %v335 = vlaneseq
      %v336 = vshrl.u32 %v335, 7
      %v337 = vsub.s32 0, %v336
      %v338 = vrot.slane %v333, %v337
      %v340 = vld [vmem:[#allocation2] sm:$0xff]
      loop: start=0, step=1, limit=8
      $region37: #{bidirectional_gru_forward.3} parent=31 // loop_pre_header
        _
      $region38: #{bidirectional_gru_forward.3} parent=31 // loop_header
        %s342 = sphi 0, %s346
        %p343 = scmp.ge.s32.totalorder %s342, 8
        %v347 = vphi %v340, %v591
      $region39: #{bidirectional_gru_forward.3} parent=31 // loop_header_branch
        %345 = sbr.rel (%p343) target = $region43
      $region40: #{bidirectional_gru_forward.3} parent=31 // loop_body
        %s348 = smul.u32 %s342, 2
        %s349 = ssub.s32 7, %s348
        %s350 = smul.u32 %s18, %s349
        %s351 = sadd.s32 %s342, %s350
        %s352 = smul.u32 %s351, 3
        %s353 = smul.addr %s352, 4
        %s354 = scalar_lea.vmem %s263, %s353
        %v355 = vld [vmem:[%s354] sm:$0xff]
        %v356 = vld [vmem:[%s354 + $0x8] sm:$0xf]
        %v357 = vunpack.c.l.bf16 %v355
        %v358 = vunpack.c.h.bf16 %v355
        %v359 = vunpack.c.l.bf16 %v356
        %v360 = vpack.c.bf16 %v347, %v347
        %v393 = vunpack.c.l.b16 %v301
        %v394 = vunpack.c.h.b16 %v301
        %v395 = vunpack.c.l.b16 %v302
        %v396 = vunpack.c.l.b16 %v303
        %v397 = vunpack.c.h.b16 %v303
        %v398 = vunpack.c.l.b16 %v304
        %v399 = vunpack.c.l.b16 %v305
        %v400 = vunpack.c.h.b16 %v305
        %v401 = vunpack.c.l.b16 %v306
        %v402 = vunpack.c.l.b16 %v307
        %v403 = vunpack.c.h.b16 %v307
        %v404 = vunpack.c.l.b16 %v308
        %v405 = vunpack.c.l.b16 %v309
        %v406 = vunpack.c.h.b16 %v309
        %v407 = vunpack.c.l.b16 %v310
        %v408 = vunpack.c.l.b16 %v311
        %v409 = vunpack.c.h.b16 %v311
        %v410 = vunpack.c.l.b16 %v312
        %v411 = vunpack.c.l.b16 %v313
        %v412 = vunpack.c.h.b16 %v313
        %v413 = vunpack.c.l.b16 %v314
        %v414 = vunpack.c.l.b16 %v315
        %v415 = vunpack.c.h.b16 %v315
        %v416 = vunpack.c.l.b16 %v316
        %v417 = vunpack.c.l.b16 %v317
        %v418 = vunpack.c.h.b16 %v317
        %v419 = vunpack.c.l.b16 %v318
        %v420 = vunpack.c.l.b16 %v319
        %v421 = vunpack.c.h.b16 %v319
        %v422 = vunpack.c.l.b16 %v320
        %v423 = vunpack.c.l.b16 %v321
        %v424 = vunpack.c.h.b16 %v321
        %v425 = vunpack.c.l.b16 %v322
        %v426 = vunpack.c.l.b16 %v323
        %v427 = vunpack.c.h.b16 %v323
        %v428 = vunpack.c.l.b16 %v324
        %v429 = vunpack.c.l.b16 %v325
        %v430 = vunpack.c.h.b16 %v325
        %v431 = vunpack.c.l.b16 %v326
        %v432 = vunpack.c.l.b16 %v327
        %v433 = vunpack.c.h.b16 %v327
        %v434 = vunpack.c.l.b16 %v328
        %v435 = vunpack.c.l.b16 %v329
        %v436 = vunpack.c.h.b16 %v329
        %v437 = vunpack.c.l.b16 %v330
        %v438 = vunpack.c.l.b16 %v331
        %v439 = vunpack.c.h.b16 %v331
        %v440 = vunpack.c.l.b16 %v332
        %v441 = vpack.c.b16 %v396, %v393
        %v442 = vpack.c.b16 %v397, %v394
        %v443 = vpack.c.b16 %v398, %v395
        %v444 = vpack.c.b16 %v402, %v399
        %v445 = vpack.c.b16 %v403, %v400
        %v446 = vpack.c.b16 %v404, %v401
        %v447 = vpack.c.b16 %v408, %v405
        %v448 = vpack.c.b16 %v409, %v406
        %v449 = vpack.c.b16 %v410, %v407
        %v450 = vpack.c.b16 %v414, %v411
        %v451 = vpack.c.b16 %v415, %v412
        %v452 = vpack.c.b16 %v416, %v413
        %v453 = vpack.c.b16 %v420, %v417
        %v454 = vpack.c.b16 %v421, %v418
        %v455 = vpack.c.b16 %v422, %v419
        %v456 = vpack.c.b16 %v426, %v423
        %v457 = vpack.c.b16 %v427, %v424
        %v458 = vpack.c.b16 %v428, %v425
        %v459 = vpack.c.b16 %v432, %v429
        %v460 = vpack.c.b16 %v433, %v430
        %v461 = vpack.c.b16 %v434, %v431
        %v462 = vpack.c.b16 %v438, %v435
        %v463 = vpack.c.b16 %v439, %v436
        %v464 = vpack.c.b16 %v440, %v437
        %489 = vmatprep.subr.bf16.mxu0 %v442
        %490 = vmatpush1.bf16.msra.mxu0 %v441
        %491 = vmatprep.subr.bf16.mxu0 %v445
        %492 = vmatpush1.bf16.msra.mxu0 %v444
        %493 = vmatprep.subr.bf16.mxu0 %v448
        %494 = vmatpush1.bf16.msra.mxu0 %v447
        %495 = vmatprep.subr.bf16.mxu0 %v451
        %496 = vmatpush1.bf16.msra.mxu0 %v450
        %497 = vmatprep.subr.bf16.mxu0 %v454
        %498 = vmatpush1.bf16.msra.mxu0 %v453
        %499 = vmatprep.subr.bf16.mxu0 %v457
        %500 = vmatpush1.bf16.msra.mxu0 %v456
        %501 = vmatprep.subr.bf16.mxu0 %v460
        %502 = vmatpush1.bf16.msra.mxu0 %v459
        %503 = vmatprep.subr.bf16.mxu0 %v463
        %504 = vmatpush1.bf16.msra.mxu0 %v462
        %505 = vmatprep.subr.bf16.mxu0 0
        %506 = vmatpush1.bf16.msra.mxu0 0
        %507 = vmatprep.subr.bf16.mxu0 0
        %508 = vmatpush1.bf16.msra.mxu0 0
        %509 = vmatprep.subr.bf16.mxu0 0
        %510 = vmatpush1.bf16.msra.mxu0 0
        %511 = vmatprep.subr.bf16.mxu0 0
        %512 = vmatpush1.bf16.msra.mxu0 0
        %513 = vmatprep.subr.bf16.mxu0 0
        %514 = vmatpush1.bf16.msra.mxu0 0
        %515 = vmatprep.subr.bf16.mxu0 0
        %516 = vmatpush1.bf16.msra.mxu0 0
        %517 = vmatprep.subr.bf16.mxu0 0
        %518 = vmatpush1.bf16.msra.mxu0 0
        %519 = vmatprep.subr.bf16.mxu0 0
        %520 = vmatpush1.bf16.msra.mxu0 0
        %521 = vmatprep.mubr.bf16.mxu0 0
        %522 = vmatmul.mubr.bf16.gmra.mrb[0].mxu0 %v360
        %v523 = vpop.f32.mrb[0].mxu0
        %v524 = vadd.f32 0.0, %v523
        %v525 = vpop.f32.mrb[0].mxu0
        %v526 = vadd.f32 0.0, %v525
        %v527 = vpop.f32.mrb[0].mxu0
        %v528 = vpop.f32.mrb[0].mxu0
        %529 = vdwg.mxu0
        %530 = vmatprep.subr.bf16.mxu0 0
        %531 = vmatpush1.bf16.msra.mxu0 %v443
        %532 = vmatprep.subr.bf16.mxu0 0
        %533 = vmatpush1.bf16.msra.mxu0 %v446
        %534 = vmatprep.subr.bf16.mxu0 0
        %535 = vmatpush1.bf16.msra.mxu0 %v449
        %536 = vmatprep.subr.bf16.mxu0 0
        %537 = vmatpush1.bf16.msra.mxu0 %v452
        %538 = vmatprep.subr.bf16.mxu0 0
        %539 = vmatpush1.bf16.msra.mxu0 %v455
        %540 = vmatprep.subr.bf16.mxu0 0
        %541 = vmatpush1.bf16.msra.mxu0 %v458
        %542 = vmatprep.subr.bf16.mxu0 0
        %543 = vmatpush1.bf16.msra.mxu0 %v461
        %544 = vmatprep.subr.bf16.mxu0 0
        %545 = vmatpush1.bf16.msra.mxu0 %v464
        %546 = vmatprep.subr.bf16.mxu0 0
        %547 = vmatpush1.bf16.msra.mxu0 0
        %548 = vmatprep.subr.bf16.mxu0 0
        %549 = vmatpush1.bf16.msra.mxu0 0
        %550 = vmatprep.subr.bf16.mxu0 0
        %551 = vmatpush1.bf16.msra.mxu0 0
        %552 = vmatprep.subr.bf16.mxu0 0
        %553 = vmatpush1.bf16.msra.mxu0 0
        %554 = vmatprep.subr.bf16.mxu0 0
        %555 = vmatpush1.bf16.msra.mxu0 0
        %556 = vmatprep.subr.bf16.mxu0 0
        %557 = vmatpush1.bf16.msra.mxu0 0
        %558 = vmatprep.subr.bf16.mxu0 0
        %559 = vmatpush1.bf16.msra.mxu0 0
        %560 = vmatprep.subr.bf16.mxu0 0
        %561 = vmatpush1.bf16.msra.mxu0 0
        %562 = vmatprep.mubr.bf16.mxu0 0
        %563 = vmatmul.mubr.bf16.gmra.mrb[0].mxu0 %v360
        %v564 = vpop.f32.mrb[0].mxu0
        %v565 = vadd.f32 0.0, %v564
        %v566 = vpop.f32.mrb[0].mxu0
        %v567 = vpop.f32.mrb[0].mxu0
        %v568 = vpop.f32.mrb[0].mxu0
        %569 = vdwg.mxu0
        %v570 = vadd.f32 %v357, %v524
        %v571 = vxor.u32 %v570, 2147483648
        %v572 = vmul.f32 %v571, 1.442695
        %v573 = vpow.pop %v572
        %v574 = vadd.f32 %v573, 1.0
        %v575 = vrcp.pop %v574
        %v576 = vmul.f32 1.0, %v575
        %v577 = vadd.f32 %v358, %v526
        %v578 = vxor.u32 %v577, 2147483648
        %v579 = vmul.f32 %v578, 1.442695
        %v580 = vpow.pop %v579
        %v581 = vadd.f32 %v580, 1.0
        %v582 = vrcp.pop %v581
        %v583 = vmul.f32 1.0, %v582
        %v584 = vadd.f32 %v565, %v338
        %v585 = vmul.f32 %v576, %v584
        %v586 = vadd.f32 %v359, %v585
        %v587 = vtanh.pop %v586
        %v588 = vsub.f32 1.0, %v583
        %v589 = vmul.f32 %v588, %v587
        %v590 = vmul.f32 %v583, %v347
        %v591 = vadd.f32 %v589, %v590
        %s592 = smul.u32 %s351, 8
        %s593 = scalar_lea.vmem %s289, %s592
        %594 = vst [vmem:[%s593] sm:$0xff] %v591
      $region41: #{bidirectional_gru_forward.3} parent=31 // loop_footer
        %s346 = sadd.s32 1, %s342
      $region42: #{bidirectional_gru_forward.3} parent=31 // loop_footer_branch
        %341 = sbr.rel target = $region38
      $region43: #{bidirectional_gru_forward.3} parent=31 // loop_exit
        _
      %595 = vst [vmem:[#allocation2] sm:$0xff] %v347
      %s596 = smul.u32 %s19, 2
      %s597 = ssub.s32 0, %s596
      %s598 = smul.u32 %s18, %s597
      %s599 = sadd.s32 %s19, %s598
      %s600 = smul.u32 8, %s599
      %p601 = scmp.lt.s32.totalorder %s18, 1
      %s602 = scalar_select %p601, %s18, 1
      %p603 = scmp.lt.s32.totalorder %s600, 7
      %s604 = scalar_select %p603, %s600, 7
      %s605 = smul.addr %s602, 8
      %s606 = sadd.s32 %s604, %s605
      %s607 = smul.addr %s606, 8
      %s608 = scalar_lea.vmem %s3, %s607
      // Predicated region
      $region44: #{bidirectional_gru_forward.3} parent=31 // pred_check
        %p609 = pneg %p142
      $region45: #{bidirectional_gru_forward.3} parent=31 // pred_check_branch
        %611 = sbr.rel (%p609) target = $region47
      $region46: #{bidirectional_gru_forward.3} parent=31 // pred_region
        %s612 = smul.u32 %s19, 2
        %s613 = ssub.s32 0, %s612
        %s614 = smul.u32 %s18, %s613
        %s615 = sadd.s32 %s19, %s614
        %s616 = smul.u32 8, %s615
      $region47: #{bidirectional_gru_forward.3} parent=31 // pred_fallthru
        _
    $region32: #{bidirectional_gru_forward.3} parent=5 // pred_fallthru
      _
    %p617 = scmp.le.s32.totalorder 2, %s9
    // Predicated region
    $region48: #{bidirectional_gru_forward.3} parent=5 // pred_check
      %p618 = pneg %p617
    $region49: #{bidirectional_gru_forward.3} parent=5 // pred_check_branch
      %620 = sbr.rel (%p618) target = $region51
    $region50: #{bidirectional_gru_forward.3} parent=5 // pred_region
      %s621 = ssub.s32 %s9, 2
      // Predicated region
      $region52: #{bidirectional_gru_forward.3} parent=50 // pred_check
        %p622 = pneg %p148
      $region53: #{bidirectional_gru_forward.3} parent=50 // pred_check_branch
        %624 = sbr.rel (%p622) target = $region55
      $region54: #{bidirectional_gru_forward.3} parent=50 // pred_region
        %s625 = smul.u32 %s21, 2
        %s626 = ssub.s32 0, %s625
        %s627 = smul.u32 %s20, %s626
        %s628 = sadd.s32 %s21, %s627
        %s629 = smul.u32 8, %s628
        %p630 = scmp.lt.s32.totalorder %s20, 1
        %s631 = scalar_select %p630, %s20, 1
        %p632 = scmp.lt.s32.totalorder %s629, 7
        %s633 = scalar_select %p632, %s629, 7
        %s634 = smul.addr %s631, 8
        %s635 = sadd.s32 %s633, %s634
        %s636 = smul.addr %s635, 8
        %s637 = scalar_lea.vmem %s3, %s636
      $region55: #{bidirectional_gru_forward.3} parent=50 // pred_fallthru
        _
    $region51: #{bidirectional_gru_forward.3} parent=5 // pred_fallthru
      _
  $region6: #{bidirectional_gru_forward.3} parent=0 // loop_footer
    %s13 = sadd.s32 1, %s9
  $region7: #{bidirectional_gru_forward.3} parent=0 // loop_footer_branch
    %8 = sbr.rel target = $region3
  $region8: #{bidirectional_gru_forward.3} parent=0 // loop_exit
    _

// kernel: bidirectional_gru_forward.2
$region0: #{bidirectional_gru_forward.2}
  #allocation0 [shape = 'u32[]', space=smem, size = 0x4, offset = 0x4, fixed_abs, tag = 'smem constant byte address 0x4 - core index']
  #allocation1 [shape = 'u32[144,128]{1,0:T(1,128)}', space=vmem, size = 0x12000, scoped, tag = 'internal scratch']
  %s0 = inlined_call_operand.vmem [shape: f32[64,32], index: 0, kind: input, shape index: {}]
  %s1 = inlined_call_operand.vmem [shape: f32[1,32], index: 1, kind: input, shape index: {}]
  %s2 = inlined_call_operand.vmem [shape: f32[1,32], index: 2, kind: input, shape index: {}]
  %s3 = inlined_call_operand.vmem [shape: bf16[2,32,384], index: 3, kind: input, shape index: {}]
  %s4 = inlined_call_operand.vmem [shape: f32[2,1,384], index: 4, kind: input, shape index: {}]
  %s5 = inlined_call_operand.vmem [shape: bf16[2,64,384], index: 5, kind: output, shape index: {}]
  %s6 = sld [smem:[#allocation0]]
  $region30: #{bidirectional_gru_forward.2} parent=0
    _
  %s8 = ssub.s32 1, %s6
  %s9 = scalar_select 0, %s8, %s6
  // Predicated region
  $region2: #{bidirectional_gru_forward.2} parent=0 // pred_check
    _
  $region3: #{bidirectional_gru_forward.2} parent=0 // pred_check_branch
    %11 = sbr.rel (0) target = $region5
  $region4: #{bidirectional_gru_forward.2} parent=0 // pred_region
    _
  $region5: #{bidirectional_gru_forward.2} parent=0 // pred_fallthru
    _
  // Predicated region
  $region6: #{bidirectional_gru_forward.2} parent=0 // pred_check
    _
  $region7: #{bidirectional_gru_forward.2} parent=0 // pred_check_branch
    %13 = sbr.rel (0) target = $region9
  $region8: #{bidirectional_gru_forward.2} parent=0 // pred_region
    _
  $region9: #{bidirectional_gru_forward.2} parent=0 // pred_fallthru
    _
  // Predicated region
  $region10: #{bidirectional_gru_forward.2} parent=0 // pred_check
    _
  $region11: #{bidirectional_gru_forward.2} parent=0 // pred_check_branch
    %15 = sbr.rel (0) target = $region13
  $region12: #{bidirectional_gru_forward.2} parent=0 // pred_region
    _
  $region13: #{bidirectional_gru_forward.2} parent=0 // pred_fallthru
    _
  // Predicated region
  $region14: #{bidirectional_gru_forward.2} parent=0 // pred_check
    _
  $region15: #{bidirectional_gru_forward.2} parent=0 // pred_check_branch
    %17 = sbr.rel (0) target = $region17
  $region16: #{bidirectional_gru_forward.2} parent=0 // pred_region
    _
  $region17: #{bidirectional_gru_forward.2} parent=0 // pred_fallthru
    _
  // Predicated region
  $region18: #{bidirectional_gru_forward.2} parent=0 // pred_check
    _
  $region19: #{bidirectional_gru_forward.2} parent=0 // pred_check_branch
    %19 = sbr.rel (0) target = $region21
  $region20: #{bidirectional_gru_forward.2} parent=0 // pred_region
    _
  $region21: #{bidirectional_gru_forward.2} parent=0 // pred_fallthru
    _
  %v21 = vld [vmem:[%s0] sm:$0xff]
  %v22 = vld [vmem:[%s0 + $0x8] sm:$0xff]
  %v23 = vld [vmem:[%s0 + $0x10] sm:$0xff]
  %v24 = vld [vmem:[%s0 + $0x18] sm:$0xff]
  %v25 = vld [vmem:[%s0 + $0x20] sm:$0xff]
  %v26 = vld [vmem:[%s0 + $0x28] sm:$0xff]
  %v27 = vld [vmem:[%s0 + $0x30] sm:$0xff]
  %v28 = vld [vmem:[%s0 + $0x38] sm:$0xff]
  %vm29 = vcmask 261120
  %v30 = vsel %vm29, %v21, 0.0
  %31 = vadd.xlane.f32.xlu0 %v30
  %v32 = vpop.xlane.xlu0 %31
  %v33 = vsel %vm29, %v22, 0.0
  %34 = vadd.xlane.f32.xlu0 %v33
  %v35 = vpop.xlane.xlu0 %34
  %v36 = vsel %vm29, %v23, 0.0
  %37 = vadd.xlane.f32.xlu0 %v36
  %v38 = vpop.xlane.xlu0 %37
  %v39 = vsel %vm29, %v24, 0.0
  %40 = vadd.xlane.f32.xlu0 %v39
  %v41 = vpop.xlane.xlu0 %40
  %v42 = vsel %vm29, %v25, 0.0
  %43 = vadd.xlane.f32.xlu0 %v42
  %v44 = vpop.xlane.xlu0 %43
  %v45 = vsel %vm29, %v26, 0.0
  %46 = vadd.xlane.f32.xlu0 %v45
  %v47 = vpop.xlane.xlu0 %46
  %v48 = vsel %vm29, %v27, 0.0
  %49 = vadd.xlane.f32.xlu0 %v48
  %v50 = vpop.xlane.xlu0 %49
  %v51 = vsel %vm29, %v28, 0.0
  %52 = vadd.xlane.f32.xlu0 %v51
  %v53 = vpop.xlane.xlu0 %52
  %v54 = vrcp.pop 32.0
  %v55 = vmul.f32 %v32, %v54
  %v56 = vmul.f32 %v35, %v54
  %v57 = vmul.f32 %v38, %v54
  %v58 = vmul.f32 %v41, %v54
  %v59 = vmul.f32 %v44, %v54
  %v60 = vmul.f32 %v47, %v54
  %v61 = vmul.f32 %v50, %v54
  %v62 = vmul.f32 %v53, %v54
  %v63 = vsub.f32 %v21, %v55
  %v64 = vsub.f32 %v22, %v56
  %v65 = vsub.f32 %v23, %v57
  %v66 = vsub.f32 %v24, %v58
  %v67 = vsub.f32 %v25, %v59
  %v68 = vsub.f32 %v26, %v60
  %v69 = vsub.f32 %v27, %v61
  %v70 = vsub.f32 %v28, %v62
  %v71 = vmul.f32 %v63, %v63
  %v72 = vmul.f32 %v64, %v64
  %v73 = vmul.f32 %v65, %v65
  %v74 = vmul.f32 %v66, %v66
  %v75 = vmul.f32 %v67, %v67
  %v76 = vmul.f32 %v68, %v68
  %v77 = vmul.f32 %v69, %v69
  %v78 = vmul.f32 %v70, %v70
  %v79 = vsel %vm29, %v71, 0.0
  %80 = vadd.xlane.f32.xlu0 %v79
  %v81 = vpop.xlane.xlu0 %80
  %v82 = vsel %vm29, %v72, 0.0
  %83 = vadd.xlane.f32.xlu0 %v82
  %v84 = vpop.xlane.xlu0 %83
  %v85 = vsel %vm29, %v73, 0.0
  %86 = vadd.xlane.f32.xlu0 %v85
  %v87 = vpop.xlane.xlu0 %86
  %v88 = vsel %vm29, %v74, 0.0
  %89 = vadd.xlane.f32.xlu0 %v88
  %v90 = vpop.xlane.xlu0 %89
  %v91 = vsel %vm29, %v75, 0.0
  %92 = vadd.xlane.f32.xlu0 %v91
  %v93 = vpop.xlane.xlu0 %92
  %v94 = vsel %vm29, %v76, 0.0
  %95 = vadd.xlane.f32.xlu0 %v94
  %v96 = vpop.xlane.xlu0 %95
  %v97 = vsel %vm29, %v77, 0.0
  %98 = vadd.xlane.f32.xlu0 %v97
  %v99 = vpop.xlane.xlu0 %98
  %v100 = vsel %vm29, %v78, 0.0
  %101 = vadd.xlane.f32.xlu0 %v100
  %v102 = vpop.xlane.xlu0 %101
  %v103 = vmul.f32 %v81, %v54
  %v104 = vmul.f32 %v84, %v54
  %v105 = vmul.f32 %v87, %v54
  %v106 = vmul.f32 %v90, %v54
  %v107 = vmul.f32 %v93, %v54
  %v108 = vmul.f32 %v96, %v54
  %v109 = vmul.f32 %v99, %v54
  %v110 = vmul.f32 %v102, %v54
  %v111 = vadd.f32 %v103, 1e-05
  %v112 = vadd.f32 %v104, 1e-05
  %v113 = vadd.f32 %v105, 1e-05
  %v114 = vadd.f32 %v106, 1e-05
  %v115 = vadd.f32 %v107, 1e-05
  %v116 = vadd.f32 %v108, 1e-05
  %v117 = vadd.f32 %v109, 1e-05
  %v118 = vadd.f32 %v110, 1e-05
  %v119 = vrsqrt.pop %v111
  %v120 = vrsqrt.pop %v112
  %v121 = vrsqrt.pop %v113
  %v122 = vrsqrt.pop %v114
  %v123 = vrsqrt.pop %v115
  %v124 = vrsqrt.pop %v116
  %v125 = vrsqrt.pop %v117
  %v126 = vrsqrt.pop %v118
  %v127 = vmul.f32 %v63, %v119
  %v128 = vmul.f32 %v64, %v120
  %v129 = vmul.f32 %v65, %v121
  %v130 = vmul.f32 %v66, %v122
  %v131 = vmul.f32 %v67, %v123
  %v132 = vmul.f32 %v68, %v124
  %v133 = vmul.f32 %v69, %v125
  %v134 = vmul.f32 %v70, %v126
  %v135 = vld [vmem:[%s1] sm:$0x1]
  %v137 = vlaneseq
  %v138 = vshrl.u32 %v137, 7
  %v139 = vsub.s32 0, %v138
  %v140 = vrot.slane %v135, %v139
  %v142 = vmul.f32 %v127, %v140
  %v143 = vmul.f32 %v128, %v140
  %v144 = vmul.f32 %v129, %v140
  %v145 = vmul.f32 %v130, %v140
  %v146 = vmul.f32 %v131, %v140
  %v147 = vmul.f32 %v132, %v140
  %v148 = vmul.f32 %v133, %v140
  %v149 = vmul.f32 %v134, %v140
  %v150 = vld [vmem:[%s2] sm:$0x1]
  %v152 = vlaneseq
  %v153 = vshrl.u32 %v152, 7
  %v154 = vsub.s32 0, %v153
  %v155 = vrot.slane %v150, %v154
  %v157 = vadd.f32 %v142, %v155
  %v158 = vadd.f32 %v143, %v155
  %v159 = vadd.f32 %v144, %v155
  %v160 = vadd.f32 %v145, %v155
  %v161 = vadd.f32 %v146, %v155
  %v162 = vadd.f32 %v147, %v155
  %v163 = vadd.f32 %v148, %v155
  %v164 = vadd.f32 %v149, %v155
  %v165 = vmul.f32 %v157, 0.5
  %v166 = vmul.f32 %v158, 0.5
  %v167 = vmul.f32 %v159, 0.5
  %v168 = vmul.f32 %v160, 0.5
  %v169 = vmul.f32 %v161, 0.5
  %v170 = vmul.f32 %v162, 0.5
  %v171 = vmul.f32 %v163, 0.5
  %v172 = vmul.f32 %v164, 0.5
  %v173 = vmul.f32 %v157, 0.70710677
  %v174 = vmul.f32 %v158, 0.70710677
  %v175 = vmul.f32 %v159, 0.70710677
  %v176 = vmul.f32 %v160, 0.70710677
  %v177 = vmul.f32 %v161, 0.70710677
  %v178 = vmul.f32 %v162, 0.70710677
  %v179 = vmul.f32 %v163, 0.70710677
  %v180 = vmul.f32 %v164, 0.70710677
  %v181 = verf.f32.pop %v173
  %v182 = verf.f32.pop %v174
  %v183 = verf.f32.pop %v175
  %v184 = verf.f32.pop %v176
  %v185 = verf.f32.pop %v177
  %v186 = verf.f32.pop %v178
  %v187 = verf.f32.pop %v179
  %v188 = verf.f32.pop %v180
  %v189 = vadd.f32 %v181, 1.0
  %v190 = vadd.f32 %v182, 1.0
  %v191 = vadd.f32 %v183, 1.0
  %v192 = vadd.f32 %v184, 1.0
  %v193 = vadd.f32 %v185, 1.0
  %v194 = vadd.f32 %v186, 1.0
  %v195 = vadd.f32 %v187, 1.0
  %v196 = vadd.f32 %v188, 1.0
  %v197 = vmul.f32 %v165, %v189
  %v198 = vmul.f32 %v166, %v190
  %v199 = vmul.f32 %v167, %v191
  %v200 = vmul.f32 %v168, %v192
  %v201 = vmul.f32 %v169, %v193
  %v202 = vmul.f32 %v170, %v194
  %v203 = vmul.f32 %v171, %v195
  %v204 = vmul.f32 %v172, %v196
  %v205 = vpack.c.bf16 %v198, %v197
  %v206 = vpack.c.bf16 %v200, %v199
  %v207 = vpack.c.bf16 %v202, %v201
  %v208 = vpack.c.bf16 %v204, %v203
  %v209 = vld [vmem:[%s3] sm:$0xff]
  %v210 = vld [vmem:[%s3 + $0x8] sm:$0xf]
  %v211 = vld [vmem:[%s3 + $0xc] sm:$0xff]
  %v212 = vld [vmem:[%s3 + $0x14] sm:$0xf]
  %v213 = vld [vmem:[%s3 + $0x18] sm:$0xff]
  %v214 = vld [vmem:[%s3 + $0x20] sm:$0xf]
  %v215 = vld [vmem:[%s3 + $0x24] sm:$0xff]
  %v216 = vld [vmem:[%s3 + $0x2c] sm:$0xf]
  %v217 = vld [vmem:[%s4] sm:$0x7]
  %v219 = vlaneseq
  %v220 = vshrl.u32 %v219, 7
  %v221 = vsub.s32 0, %v220
  %v222 = vrot.slane %v217, %v221
  %v223 = vlaneseq
  %v224 = vshrl.u32 %v223, 7
  %v225 = vsub.s32 1, %v224
  %v226 = vrot.slane %v217, %v225
  %v227 = vlaneseq
  %v228 = vshrl.u32 %v227, 7
  %v229 = vsub.s32 2, %v228
  %v230 = vrot.slane %v217, %v229
  %v242 = vunpack.c.l.b16 %v209
  %v243 = vunpack.c.h.b16 %v209
  %v244 = vunpack.c.l.b16 %v210
  %v245 = vunpack.c.l.b16 %v211
  %v246 = vunpack.c.h.b16 %v211
  %v247 = vunpack.c.l.b16 %v212
  %v248 = vunpack.c.l.b16 %v213
  %v249 = vunpack.c.h.b16 %v213
  %v250 = vunpack.c.l.b16 %v214
  %v251 = vunpack.c.l.b16 %v215
  %v252 = vunpack.c.h.b16 %v215
  %v253 = vunpack.c.l.b16 %v216
  %v254 = vpack.c.b16 %v245, %v242
  %v255 = vpack.c.b16 %v246, %v243
  %v256 = vpack.c.b16 %v247, %v244
  %v257 = vpack.c.b16 %v251, %v248
  %v258 = vpack.c.b16 %v252, %v249
  %v259 = vpack.c.b16 %v253, %v250
  %v267 = vsel %vm29, %v205, 0
  %v270 = vsel %vm29, %v206, 0
  %v273 = vsel %vm29, %v207, 0
  %v276 = vsel %vm29, %v208, 0
  %278 = vmatprep.subr.bf16.mxu0 %v255
  %279 = vmatpush1.bf16.msra.mxu0 %v254
  %280 = vmatprep.subr.bf16.mxu0 %v258
  %281 = vmatpush1.bf16.msra.mxu0 %v257
  %282 = vmatprep.subr.bf16.mxu0 0
  %283 = vmatpush1.bf16.msra.mxu0 0
  %284 = vmatprep.subr.bf16.mxu0 0
  %285 = vmatpush1.bf16.msra.mxu0 0
  %286 = vmatprep.subr.bf16.mxu0 0
  %287 = vmatpush1.bf16.msra.mxu0 0
  %288 = vmatprep.subr.bf16.mxu0 0
  %289 = vmatpush1.bf16.msra.mxu0 0
  %290 = vmatprep.subr.bf16.mxu0 0
  %291 = vmatpush1.bf16.msra.mxu0 0
  %292 = vmatprep.subr.bf16.mxu0 0
  %293 = vmatpush1.bf16.msra.mxu0 0
  %294 = vmatprep.subr.bf16.mxu0 0
  %295 = vmatpush1.bf16.msra.mxu0 0
  %296 = vmatprep.subr.bf16.mxu0 0
  %297 = vmatpush1.bf16.msra.mxu0 0
  %298 = vmatprep.subr.bf16.mxu0 0
  %299 = vmatpush1.bf16.msra.mxu0 0
  %300 = vmatprep.subr.bf16.mxu0 0
  %301 = vmatpush1.bf16.msra.mxu0 0
  %302 = vmatprep.subr.bf16.mxu0 0
  %303 = vmatpush1.bf16.msra.mxu0 0
  %304 = vmatprep.subr.bf16.mxu0 0
  %305 = vmatpush1.bf16.msra.mxu0 0
  %306 = vmatprep.subr.bf16.mxu0 0
  %307 = vmatpush1.bf16.msra.mxu0 0
  %308 = vmatprep.subr.bf16.mxu0 0
  %309 = vmatpush1.bf16.msra.mxu0 0
  %310 = vmatprep.mubr.bf16.mxu0 0
  %311 = vmatmul.mubr.bf16.gmra.mrb[0].mxu0 %v267
  %v312 = vpop.f32.mrb[0].mxu0
  %v313 = vadd.f32 %v222, %v312
  %v314 = vpop.f32.mrb[0].mxu0
  %v315 = vadd.f32 %v226, %v314
  %v316 = vpop.f32.mrb[0].mxu0
  %v317 = vadd.f32 %v222, %v316
  %v318 = vpop.f32.mrb[0].mxu0
  %v319 = vadd.f32 %v226, %v318
  %320 = vmatprep.mubr.bf16.mxu0 0
  %321 = vmatmul.mubr.bf16.gmra.mrb[0].mxu0 %v270
  %v322 = vpop.f32.mrb[0].mxu0
  %v323 = vadd.f32 %v222, %v322
  %v324 = vpop.f32.mrb[0].mxu0
  %v325 = vadd.f32 %v226, %v324
  %v326 = vpop.f32.mrb[0].mxu0
  %v327 = vadd.f32 %v222, %v326
  %v328 = vpop.f32.mrb[0].mxu0
  %v329 = vadd.f32 %v226, %v328
  %330 = vmatprep.mubr.bf16.mxu0 0
  %331 = vmatmul.mubr.bf16.gmra.mrb[0].mxu0 %v273
  %v332 = vpop.f32.mrb[0].mxu0
  %v333 = vadd.f32 %v222, %v332
  %v334 = vpop.f32.mrb[0].mxu0
  %v335 = vadd.f32 %v226, %v334
  %v336 = vpop.f32.mrb[0].mxu0
  %v337 = vadd.f32 %v222, %v336
  %v338 = vpop.f32.mrb[0].mxu0
  %v339 = vadd.f32 %v226, %v338
  %340 = vmatprep.mubr.bf16.mxu0 0
  %341 = vmatmul.mubr.bf16.gmra.mrb[0].mxu0 %v276
  %v342 = vpop.f32.mrb[0].mxu0
  %v343 = vadd.f32 %v222, %v342
  %v344 = vpop.f32.mrb[0].mxu0
  %v345 = vadd.f32 %v226, %v344
  %v346 = vpop.f32.mrb[0].mxu0
  %v347 = vadd.f32 %v222, %v346
  %v348 = vpop.f32.mrb[0].mxu0
  %v349 = vadd.f32 %v226, %v348
  %350 = vdwg.mxu0
  %351 = vmatprep.subr.bf16.mxu0 0
  %352 = vmatpush1.bf16.msra.mxu0 %v256
  %353 = vmatprep.subr.bf16.mxu0 0
  %354 = vmatpush1.bf16.msra.mxu0 %v259
  %355 = vmatprep.subr.bf16.mxu0 0
  %356 = vmatpush1.bf16.msra.mxu0 0
  %357 = vmatprep.subr.bf16.mxu0 0
  %358 = vmatpush1.bf16.msra.mxu0 0
  %359 = vmatprep.subr.bf16.mxu0 0
  %360 = vmatpush1.bf16.msra.mxu0 0
  %361 = vmatprep.subr.bf16.mxu0 0
  %362 = vmatpush1.bf16.msra.mxu0 0
  %363 = vmatprep.subr.bf16.mxu0 0
  %364 = vmatpush1.bf16.msra.mxu0 0
  %365 = vmatprep.subr.bf16.mxu0 0
  %366 = vmatpush1.bf16.msra.mxu0 0
  %367 = vmatprep.subr.bf16.mxu0 0
  %368 = vmatpush1.bf16.msra.mxu0 0
  %369 = vmatprep.subr.bf16.mxu0 0
  %370 = vmatpush1.bf16.msra.mxu0 0
  %371 = vmatprep.subr.bf16.mxu0 0
  %372 = vmatpush1.bf16.msra.mxu0 0
  %373 = vmatprep.subr.bf16.mxu0 0
  %374 = vmatpush1.bf16.msra.mxu0 0
  %375 = vmatprep.subr.bf16.mxu0 0
  %376 = vmatpush1.bf16.msra.mxu0 0
  %377 = vmatprep.subr.bf16.mxu0 0
  %378 = vmatpush1.bf16.msra.mxu0 0
  %379 = vmatprep.subr.bf16.mxu0 0
  %380 = vmatpush1.bf16.msra.mxu0 0
  %381 = vmatprep.subr.bf16.mxu0 0
  %382 = vmatpush1.bf16.msra.mxu0 0
  %383 = vmatprep.mubr.bf16.mxu0 0
  %384 = vmatmul.mubr.bf16.gmra.mrb[0].mxu0 %v267
  %v385 = vpop.f32.mrb[0].mxu0
  %v386 = vadd.f32 %v230, %v385
  %v387 = vpop.f32.mrb[0].mxu0
  %v388 = vpop.f32.mrb[0].mxu0
  %v389 = vadd.f32 %v230, %v388
  %v390 = vpop.f32.mrb[0].mxu0
  %391 = vmatprep.mubr.bf16.mxu0 0
  %392 = vmatmul.mubr.bf16.gmra.mrb[0].mxu0 %v270
  %v393 = vpop.f32.mrb[0].mxu0
  %v394 = vadd.f32 %v230, %v393
  %v395 = vpop.f32.mrb[0].mxu0
  %v396 = vpop.f32.mrb[0].mxu0
  %v397 = vadd.f32 %v230, %v396
  %v398 = vpop.f32.mrb[0].mxu0
  %399 = vmatprep.mubr.bf16.mxu0 0
  %400 = vmatmul.mubr.bf16.gmra.mrb[0].mxu0 %v273
  %v401 = vpop.f32.mrb[0].mxu0
  %v402 = vadd.f32 %v230, %v401
  %v403 = vpop.f32.mrb[0].mxu0
  %v404 = vpop.f32.mrb[0].mxu0
  %v405 = vadd.f32 %v230, %v404
  %v406 = vpop.f32.mrb[0].mxu0
  %407 = vmatprep.mubr.bf16.mxu0 0
  %408 = vmatmul.mubr.bf16.gmra.mrb[0].mxu0 %v276
  %v409 = vpop.f32.mrb[0].mxu0
  %v410 = vadd.f32 %v230, %v409
  %v411 = vpop.f32.mrb[0].mxu0
  %v412 = vpop.f32.mrb[0].mxu0
  %v413 = vadd.f32 %v230, %v412
  %v414 = vpop.f32.mrb[0].mxu0
  %415 = vdwg.mxu0
  %v416 = vpack.c.bf16 %v317, %v313
  %v417 = vpack.c.bf16 %v319, %v315
  %v418 = vpack.c.bf16 %v389, %v386
  %v419 = vpack.c.bf16 %v327, %v323
  %v420 = vpack.c.bf16 %v329, %v325
  %v421 = vpack.c.bf16 %v397, %v394
  %v422 = vpack.c.bf16 %v337, %v333
  %v423 = vpack.c.bf16 %v339, %v335
  %v424 = vpack.c.bf16 %v405, %v402
  %v425 = vpack.c.bf16 %v347, %v343
  %v426 = vpack.c.bf16 %v349, %v345
  %v427 = vpack.c.bf16 %v413, %v410
  %v440 = vunpack.c.l.b16 %v416
  %v441 = vunpack.c.l.b16 %v417
  %v442 = vunpack.c.l.b16 %v418
  %v443 = vunpack.c.h.b16 %v416
  %v444 = vunpack.c.h.b16 %v417
  %v445 = vunpack.c.h.b16 %v418
  %v446 = vunpack.c.l.b16 %v419
  %v447 = vunpack.c.l.b16 %v420
  %v448 = vunpack.c.l.b16 %v421
  %v449 = vunpack.c.h.b16 %v419
  %v450 = vunpack.c.h.b16 %v420
  %v451 = vunpack.c.h.b16 %v421
  %v452 = vunpack.c.l.b16 %v422
  %v453 = vunpack.c.l.b16 %v423
  %v454 = vunpack.c.l.b16 %v424
  %v455 = vunpack.c.h.b16 %v422
  %v456 = vunpack.c.h.b16 %v423
  %v457 = vunpack.c.h.b16 %v424
  %v458 = vunpack.c.l.b16 %v425
  %v459 = vunpack.c.l.b16 %v426
  %v460 = vunpack.c.l.b16 %v427
  %v461 = vunpack.c.h.b16 %v425
  %v462 = vunpack.c.h.b16 %v426
  %v463 = vunpack.c.h.b16 %v427
  %v464 = vpack.c.b16 %v441, %v440
  %v465 = vpack.c.b16 %v442, %v442
  %v466 = vpack.c.b16 %v444, %v443
  %v467 = vpack.c.b16 %v445, %v445
  %v468 = vpack.c.b16 %v447, %v446
  %v469 = vpack.c.b16 %v448, %v448
  %v470 = vpack.c.b16 %v450, %v449
  %v471 = vpack.c.b16 %v451, %v451
  %v472 = vpack.c.b16 %v453, %v452
  %v473 = vpack.c.b16 %v454, %v454
  %v474 = vpack.c.b16 %v456, %v455
  %v475 = vpack.c.b16 %v457, %v457
  %v476 = vpack.c.b16 %v459, %v458
  %v477 = vpack.c.b16 %v460, %v460
  %v478 = vpack.c.b16 %v462, %v461
  %v479 = vpack.c.b16 %v463, %v463
  %496 = vst [vmem:[%s5] sm:$0xff] %v464
  %497 = vst [vmem:[%s5 + $0x8] sm:$0xf] %v465
  %498 = vst [vmem:[%s5 + $0xc] sm:$0xff] %v466
  %499 = vst [vmem:[%s5 + $0x14] sm:$0xf] %v467
  %500 = vst [vmem:[%s5 + $0x18] sm:$0xff] %v468
  %501 = vst [vmem:[%s5 + $0x20] sm:$0xf] %v469
  %502 = vst [vmem:[%s5 + $0x24] sm:$0xff] %v470
  %503 = vst [vmem:[%s5 + $0x2c] sm:$0xf] %v471
  %504 = vst [vmem:[%s5 + $0x30] sm:$0xff] %v472
  %505 = vst [vmem:[%s5 + $0x38] sm:$0xf] %v473
  %506 = vst [vmem:[%s5 + $0x3c] sm:$0xff] %v474
  %507 = vst [vmem:[%s5 + $0x44] sm:$0xf] %v475
  %508 = vst [vmem:[%s5 + $0x48] sm:$0xff] %v476
  %509 = vst [vmem:[%s5 + $0x50] sm:$0xf] %v477
  %510 = vst [vmem:[%s5 + $0x54] sm:$0xff] %v478
  %511 = vst [vmem:[%s5 + $0x5c] sm:$0xf] %v479
  %s512 = scalar_lea.vmem %s3, 48
  %v513 = vld [vmem:[%s512] sm:$0xff]
  %v514 = vld [vmem:[%s512 + $0x8] sm:$0xf]
  %v515 = vld [vmem:[%s512 + $0xc] sm:$0xff]
  %v516 = vld [vmem:[%s512 + $0x14] sm:$0xf]
  %v517 = vld [vmem:[%s512 + $0x18] sm:$0xff]
  %v518 = vld [vmem:[%s512 + $0x20] sm:$0xf]
  %v519 = vld [vmem:[%s512 + $0x24] sm:$0xff]
  %v520 = vld [vmem:[%s512 + $0x2c] sm:$0xf]
  %s521 = scalar_lea.vmem %s4, 3
  %v522 = vld [vmem:[%s521] sm:$0x7]
  %v524 = vlaneseq
  %v525 = vshrl.u32 %v524, 7
  %v526 = vsub.s32 0, %v525
  %v527 = vrot.slane %v522, %v526
  %v528 = vlaneseq
  %v529 = vshrl.u32 %v528, 7
  %v530 = vsub.s32 1, %v529
  %v531 = vrot.slane %v522, %v530
  %v532 = vlaneseq
  %v533 = vshrl.u32 %v532, 7
  %v534 = vsub.s32 2, %v533
  %v535 = vrot.slane %v522, %v534
  %v547 = vunpack.c.l.b16 %v513
  %v548 = vunpack.c.h.b16 %v513
  %v549 = vunpack.c.l.b16 %v514
  %v550 = vunpack.c.l.b16 %v515
  %v551 = vunpack.c.h.b16 %v515
  %v552 = vunpack.c.l.b16 %v516
  %v553 = vunpack.c.l.b16 %v517
  %v554 = vunpack.c.h.b16 %v517
  %v555 = vunpack.c.l.b16 %v518
  %v556 = vunpack.c.l.b16 %v519
  %v557 = vunpack.c.h.b16 %v519
  %v558 = vunpack.c.l.b16 %v520
  %v559 = vpack.c.b16 %v550, %v547
  %v560 = vpack.c.b16 %v551, %v548
  %v561 = vpack.c.b16 %v552, %v549
  %v562 = vpack.c.b16 %v556, %v553
  %v563 = vpack.c.b16 %v557, %v554
  %v564 = vpack.c.b16 %v558, %v555
  %571 = vmatprep.subr.bf16.mxu0 %v560
  %572 = vmatpush1.bf16.msra.mxu0 %v559
  %573 = vmatprep.subr.bf16.mxu0 %v563
  %574 = vmatpush1.bf16.msra.mxu0 %v562
  %575 = vmatprep.subr.bf16.mxu0 0
  %576 = vmatpush1.bf16.msra.mxu0 0
  %577 = vmatprep.subr.bf16.mxu0 0
  %578 = vmatpush1.bf16.msra.mxu0 0
  %579 = vmatprep.subr.bf16.mxu0 0
  %580 = vmatpush1.bf16.msra.mxu0 0
  %581 = vmatprep.subr.bf16.mxu0 0
  %582 = vmatpush1.bf16.msra.mxu0 0
  %583 = vmatprep.subr.bf16.mxu0 0
  %584 = vmatpush1.bf16.msra.mxu0 0
  %585 = vmatprep.subr.bf16.mxu0 0
  %586 = vmatpush1.bf16.msra.mxu0 0
  %587 = vmatprep.subr.bf16.mxu0 0
  %588 = vmatpush1.bf16.msra.mxu0 0
  %589 = vmatprep.subr.bf16.mxu0 0
  %590 = vmatpush1.bf16.msra.mxu0 0
  %591 = vmatprep.subr.bf16.mxu0 0
  %592 = vmatpush1.bf16.msra.mxu0 0
  %593 = vmatprep.subr.bf16.mxu0 0
  %594 = vmatpush1.bf16.msra.mxu0 0
  %595 = vmatprep.subr.bf16.mxu0 0
  %596 = vmatpush1.bf16.msra.mxu0 0
  %597 = vmatprep.subr.bf16.mxu0 0
  %598 = vmatpush1.bf16.msra.mxu0 0
  %599 = vmatprep.subr.bf16.mxu0 0
  %600 = vmatpush1.bf16.msra.mxu0 0
  %601 = vmatprep.subr.bf16.mxu0 0
  %602 = vmatpush1.bf16.msra.mxu0 0
  %603 = vmatprep.mubr.bf16.mxu0 0
  %604 = vmatmul.mubr.bf16.gmra.mrb[0].mxu0 %v267
  %v605 = vpop.f32.mrb[0].mxu0
  %v606 = vadd.f32 %v527, %v605
  %v607 = vpop.f32.mrb[0].mxu0
  %v608 = vadd.f32 %v531, %v607
  %v609 = vpop.f32.mrb[0].mxu0
  %v610 = vadd.f32 %v527, %v609
  %v611 = vpop.f32.mrb[0].mxu0
  %v612 = vadd.f32 %v531, %v611
  %613 = vmatprep.mubr.bf16.mxu0 0
  %614 = vmatmul.mubr.bf16.gmra.mrb[0].mxu0 %v270
  %v615 = vpop.f32.mrb[0].mxu0
  %v616 = vadd.f32 %v527, %v615
  %v617 = vpop.f32.mrb[0].mxu0
  %v618 = vadd.f32 %v531, %v617
  %v619 = vpop.f32.mrb[0].mxu0
  %v620 = vadd.f32 %v527, %v619
  %v621 = vpop.f32.mrb[0].mxu0
  %v622 = vadd.f32 %v531, %v621
  %623 = vmatprep.mubr.bf16.mxu0 0
  %624 = vmatmul.mubr.bf16.gmra.mrb[0].mxu0 %v273
  %v625 = vpop.f32.mrb[0].mxu0
  %v626 = vadd.f32 %v527, %v625
  %v627 = vpop.f32.mrb[0].mxu0
  %v628 = vadd.f32 %v531, %v627
  %v629 = vpop.f32.mrb[0].mxu0
  %v630 = vadd.f32 %v527, %v629
  %v631 = vpop.f32.mrb[0].mxu0
  %v632 = vadd.f32 %v531, %v631
  %633 = vmatprep.mubr.bf16.mxu0 0
  %634 = vmatmul.mubr.bf16.gmra.mrb[0].mxu0 %v276
  %v635 = vpop.f32.mrb[0].mxu0
  %v636 = vadd.f32 %v527, %v635
  %v637 = vpop.f32.mrb[0].mxu0
  %v638 = vadd.f32 %v531, %v637
  %v639 = vpop.f32.mrb[0].mxu0
  %v640 = vadd.f32 %v527, %v639
  %v641 = vpop.f32.mrb[0].mxu0
  %v642 = vadd.f32 %v531, %v641
  %643 = vdwg.mxu0
  %644 = vmatprep.subr.bf16.mxu0 0
  %645 = vmatpush1.bf16.msra.mxu0 %v561
  %646 = vmatprep.subr.bf16.mxu0 0
  %647 = vmatpush1.bf16.msra.mxu0 %v564
  %648 = vmatprep.subr.bf16.mxu0 0
  %649 = vmatpush1.bf16.msra.mxu0 0
  %650 = vmatprep.subr.bf16.mxu0 0
  %651 = vmatpush1.bf16.msra.mxu0 0
  %652 = vmatprep.subr.bf16.mxu0 0
  %653 = vmatpush1.bf16.msra.mxu0 0
  %654 = vmatprep.subr.bf16.mxu0 0
  %655 = vmatpush1.bf16.msra.mxu0 0
  %656 = vmatprep.subr.bf16.mxu0 0
  %657 = vmatpush1.bf16.msra.mxu0 0
  %658 = vmatprep.subr.bf16.mxu0 0
  %659 = vmatpush1.bf16.msra.mxu0 0
  %660 = vmatprep.subr.bf16.mxu0 0
  %661 = vmatpush1.bf16.msra.mxu0 0
  %662 = vmatprep.subr.bf16.mxu0 0
  %663 = vmatpush1.bf16.msra.mxu0 0
  %664 = vmatprep.subr.bf16.mxu0 0
  %665 = vmatpush1.bf16.msra.mxu0 0
  %666 = vmatprep.subr.bf16.mxu0 0
  %667 = vmatpush1.bf16.msra.mxu0 0
  %668 = vmatprep.subr.bf16.mxu0 0
  %669 = vmatpush1.bf16.msra.mxu0 0
  %670 = vmatprep.subr.bf16.mxu0 0
  %671 = vmatpush1.bf16.msra.mxu0 0
  %672 = vmatprep.subr.bf16.mxu0 0
  %673 = vmatpush1.bf16.msra.mxu0 0
  %674 = vmatprep.subr.bf16.mxu0 0
  %675 = vmatpush1.bf16.msra.mxu0 0
  %676 = vmatprep.mubr.bf16.mxu0 0
  %677 = vmatmul.mubr.bf16.gmra.mrb[0].mxu0 %v267
  %v678 = vpop.f32.mrb[0].mxu0
  %v679 = vadd.f32 %v535, %v678
  %v680 = vpop.f32.mrb[0].mxu0
  %v681 = vpop.f32.mrb[0].mxu0
  %v682 = vadd.f32 %v535, %v681
  %v683 = vpop.f32.mrb[0].mxu0
  %684 = vmatprep.mubr.bf16.mxu0 0
  %685 = vmatmul.mubr.bf16.gmra.mrb[0].mxu0 %v270
  %v686 = vpop.f32.mrb[0].mxu0
  %v687 = vadd.f32 %v535, %v686
  %v688 = vpop.f32.mrb[0].mxu0
  %v689 = vpop.f32.mrb[0].mxu0
  %v690 = vadd.f32 %v535, %v689
  %v691 = vpop.f32.mrb[0].mxu0
  %692 = vmatprep.mubr.bf16.mxu0 0
  %693 = vmatmul.mubr.bf16.gmra.mrb[0].mxu0 %v273
  %v694 = vpop.f32.mrb[0].mxu0
  %v695 = vadd.f32 %v535, %v694
  %v696 = vpop.f32.mrb[0].mxu0
  %v697 = vpop.f32.mrb[0].mxu0
  %v698 = vadd.f32 %v535, %v697
  %v699 = vpop.f32.mrb[0].mxu0
  %700 = vmatprep.mubr.bf16.mxu0 0
  %701 = vmatmul.mubr.bf16.gmra.mrb[0].mxu0 %v276
  %v702 = vpop.f32.mrb[0].mxu0
  %v703 = vadd.f32 %v535, %v702
  %v704 = vpop.f32.mrb[0].mxu0
  %v705 = vpop.f32.mrb[0].mxu0
  %v706 = vadd.f32 %v535, %v705
  %v707 = vpop.f32.mrb[0].mxu0
  %708 = vdwg.mxu0
  %v709 = vpack.c.bf16 %v610, %v606
  %v710 = vpack.c.bf16 %v612, %v608
  %v711 = vpack.c.bf16 %v682, %v679
  %v712 = vpack.c.bf16 %v620, %v616
  %v713 = vpack.c.bf16 %v622, %v618
  %v714 = vpack.c.bf16 %v690, %v687
  %v715 = vpack.c.bf16 %v630, %v626
  %v716 = vpack.c.bf16 %v632, %v628
  %v717 = vpack.c.bf16 %v698, %v695
  %v718 = vpack.c.bf16 %v640, %v636
  %v719 = vpack.c.bf16 %v642, %v638
  %v720 = vpack.c.bf16 %v706, %v703
  %v733 = vunpack.c.l.b16 %v709
  %v734 = vunpack.c.l.b16 %v710
  %v735 = vunpack.c.l.b16 %v711
  %v736 = vunpack.c.h.b16 %v709
  %v737 = vunpack.c.h.b16 %v710
  %v738 = vunpack.c.h.b16 %v711
  %v739 = vunpack.c.l.b16 %v712
  %v740 = vunpack.c.l.b16 %v713
  %v741 = vunpack.c.l.b16 %v714
  %v742 = vunpack.c.h.b16 %v712
  %v743 = vunpack.c.h.b16 %v713
  %v744 = vunpack.c.h.b16 %v714
  %v745 = vunpack.c.l.b16 %v715
  %v746 = vunpack.c.l.b16 %v716
  %v747 = vunpack.c.l.b16 %v717
  %v748 = vunpack.c.h.b16 %v715
  %v749 = vunpack.c.h.b16 %v716
  %v750 = vunpack.c.h.b16 %v717
  %v751 = vunpack.c.l.b16 %v718
  %v752 = vunpack.c.l.b16 %v719
  %v753 = vunpack.c.l.b16 %v720
  %v754 = vunpack.c.h.b16 %v718
  %v755 = vunpack.c.h.b16 %v719
  %v756 = vunpack.c.h.b16 %v720
  %v757 = vpack.c.b16 %v734, %v733
  %v758 = vpack.c.b16 %v735, %v735
  %v759 = vpack.c.b16 %v737, %v736
  %v760 = vpack.c.b16 %v738, %v738
  %v761 = vpack.c.b16 %v740, %v739
  %v762 = vpack.c.b16 %v741, %v741
  %v763 = vpack.c.b16 %v743, %v742
  %v764 = vpack.c.b16 %v744, %v744
  %v765 = vpack.c.b16 %v746, %v745
  %v766 = vpack.c.b16 %v747, %v747
  %v767 = vpack.c.b16 %v749, %v748
  %v768 = vpack.c.b16 %v750, %v750
  %v769 = vpack.c.b16 %v752, %v751
  %v770 = vpack.c.b16 %v753, %v753
  %v771 = vpack.c.b16 %v755, %v754
  %v772 = vpack.c.b16 %v756, %v756
  %s789 = scalar_lea.vmem %s5, 96
  %790 = vst [vmem:[%s789] sm:$0xff] %v757
  %791 = vst [vmem:[%s789 + $0x8] sm:$0xf] %v758
  %792 = vst [vmem:[%s789 + $0xc] sm:$0xff] %v759
  %793 = vst [vmem:[%s789 + $0x14] sm:$0xf] %v760
  %794 = vst [vmem:[%s789 + $0x18] sm:$0xff] %v761
  %795 = vst [vmem:[%s789 + $0x20] sm:$0xf] %v762
  %796 = vst [vmem:[%s789 + $0x24] sm:$0xff] %v763
  %797 = vst [vmem:[%s789 + $0x2c] sm:$0xf] %v764
  %798 = vst [vmem:[%s789 + $0x30] sm:$0xff] %v765
  %799 = vst [vmem:[%s789 + $0x38] sm:$0xf] %v766
  %800 = vst [vmem:[%s789 + $0x3c] sm:$0xff] %v767
  %801 = vst [vmem:[%s789 + $0x44] sm:$0xf] %v768
  %802 = vst [vmem:[%s789 + $0x48] sm:$0xff] %v769
  %803 = vst [vmem:[%s789 + $0x50] sm:$0xf] %v770
  %804 = vst [vmem:[%s789 + $0x54] sm:$0xff] %v771
  %805 = vst [vmem:[%s789 + $0x5c] sm:$0xf] %v772
  // Predicated region
  $region22: #{bidirectional_gru_forward.2} parent=0 // pred_check
    _
  $region23: #{bidirectional_gru_forward.2} parent=0 // pred_check_branch
    %807 = sbr.rel (0) target = $region25
  $region24: #{bidirectional_gru_forward.2} parent=0 // pred_region
    _
  $region25: #{bidirectional_gru_forward.2} parent=0 // pred_fallthru
    _
  // Predicated region
  $region26: #{bidirectional_gru_forward.2} parent=0 // pred_check
    _
  $region27: #{bidirectional_gru_forward.2} parent=0 // pred_check_branch
    %809 = sbr.rel (0) target = $region29
  $region28: #{bidirectional_gru_forward.2} parent=0 // pred_region
    _
  $region29: #{bidirectional_gru_forward.2} parent=0 // pred_fallthru
    _

</llo_original>
